<compile_context>
chip_gen: v7x
topology: tpu7x:2x2x1
jax: 0.10.0
libtpu: 0.0.40
codegen_flags: <defaults>
</compile_context>

<pallas_src>
import jax
import jax.numpy as jnp
from jax import lax
from jax.experimental import pallas as pl
from jax.experimental.pallas import tpu as pltpu

EPS = 1e-5


def _layernorm(v, g, b):
    mu = jnp.mean(v, axis=-1, keepdims=True)
    var = jnp.mean((v - mu) ** 2, axis=-1, keepdims=True)
    return (v - mu) * lax.rsqrt(var + EPS) * g + b


def _softmax_approx(s):
    m = jnp.max(s, axis=-1, keepdims=True)
    e = jnp.exp(s - m)
    return e * pl.reciprocal(jnp.sum(e, axis=-1, keepdims=True), approx=True)


def _pick_tq(T, max_tq=256):
    """Largest query tile <= max_tq that divides T (multiple of 8 when possible)."""
    if T <= max_tq:
        return T
    for tq in range(max_tq, 7, -1):
        if T % tq == 0 and tq % 8 == 0:
            return tq
    return T


def build_fused_qkv(p, num_heads):
    """Fuse per-head (H, E, hs) weights into one (E, 5E) bf16 matrix.

    Column layout: [q1 | k1 | q2 | k2 | v]; within each component, head h occupies
    columns h*hs:(h+1)*hs.  The 1/sqrt(hs) score scale is folded into q1/q2.
    """
    hs = p["wq1"].shape[-1]
    scale = float(hs) ** -0.5

    def flat(w):  # (H, E, hs) -> (E, H*hs)
        return jnp.transpose(w, (1, 0, 2)).reshape(w.shape[1], -1)

    wf = jnp.concatenate(
        [flat(p["wq1"]) * scale, flat(p["wk1"]),
         flat(p["wq2"]) * scale, flat(p["wk2"]), flat(p["wv"])], axis=1)
    return wf.astype(jnp.bfloat16)


def make_block_kernel(num_heads, head_size, T, TQ):
    E = num_heads * head_size
    NQ = T // TQ
    bf16 = jnp.bfloat16

    def block_kernel(
        x_ref,            # (1, T, E)  f32   full sequence for this batch element
        ln1_g, ln1_b,     # (1, E)     f32
        wfused_ref,       # (E, 5E)    bf16  fused q1|k1|q2|k2|v weights (scale folded)
        norm_g, norm_b,   # (1, E)     f32   MultiHead LayerNorm
        lamb_ref,         # (1,)       f32   in SMEM
        ln2_g, ln2_b,     # (1, E)     f32
        w1t_ref, b1_ref,  # (E, 4E) bf16, (1, 4E) f32
        w2t_ref, b2_ref,  # (4E, E) bf16, (1, E)  f32
        o_ref,            # (1, TQ, E) f32
        proj_ref,         # scratch: (T, 5E) bf16 — cached fused projections
        sa_ref,           # scratch: (TQ, E) f32  — head-output assembly
    ):
        qi = pl.program_id(1)
        lamb = lamb_ref[0]

        # ---- once per batch element: ln1 + fused QKV projection of the full sequence
        @pl.when(qi == 0)
        def _():
            for rt in range(NQ):                       # static, small unroll
                r0 = rt * TQ
                xr = x_ref[0, pl.ds(r0, TQ), :]        # (TQ, E) f32
                hr = _layernorm(xr, ln1_g[0], ln1_b[0]).astype(bf16)
                proj_ref[pl.ds(r0, TQ), :] = jnp.dot(
                    hr, wfused_ref[...], preferred_element_type=jnp.float32
                ).astype(bf16)

        q_start = pl.multiple_of(qi * TQ, TQ)
        x_q = x_ref[0, pl.ds(q_start, TQ), :]          # (TQ, E) f32  residual input

        # ---- differential attention, per head (scores are lane-dense (TQ, T))
        for hh in range(num_heads):
            c0 = hh * head_size
            q1 = proj_ref[pl.ds(q_start, TQ), pl.ds(0 * E + c0, head_size)]
            k1 = proj_ref[:, pl.ds(1 * E + c0, head_size)]
            q2 = proj_ref[pl.ds(q_start, TQ), pl.ds(2 * E + c0, head_size)]
            k2 = proj_ref[:, pl.ds(3 * E + c0, head_size)]
            v = proj_ref[:, pl.ds(4 * E + c0, head_size)]

            s1 = lax.dot_general(q1, k1, (((1,), (1,)), ((), ())),
                                 preferred_element_type=jnp.float32)   # (TQ, T)
            s2 = lax.dot_general(q2, k2, (((1,), (1,)), ((), ())),
                                 preferred_element_type=jnp.float32)
            wei = (_softmax_approx(s1) - lamb * _softmax_approx(s2)).astype(bf16)
            out_h = jnp.dot(wei, v, preferred_element_type=jnp.float32)  # (TQ, hs)
            sa_ref[:, pl.ds(c0, head_size)] = out_h

        sa = _layernorm(sa_ref[...], norm_g[0], norm_b[0])
        x1 = x_q + (1.0 - lamb) * sa                   # (TQ, E) f32

        # ---- feed-forward branch
        h2 = _layernorm(x1, ln2_g[0], ln2_b[0])
        ff = jnp.dot(h2.astype(bf16), w1t_ref[...],
                     preferred_element_type=jnp.float32) + b1_ref[0]
        ff = jnp.maximum(ff, 0.0)
        ff = jnp.dot(ff.astype(bf16), w2t_ref[...],
                     preferred_element_type=jnp.float32) + b2_ref[0]

        o_ref[0] = x1 + ff

    return block_kernel


def block_forward(x, params, num_heads, q_tile=256):
    B, T, E = x.shape
    hs = E // num_heads
    TQ = _pick_tq(T, q_tile)
    NQ = T // TQ

    wfused = build_fused_qkv(params, num_heads)            # (E, 5E) bf16
    w1t = params["w1t"].astype(jnp.bfloat16)
    w2t = params["w2t"].astype(jnp.bfloat16)
    lamb = params["lamb"].reshape((1,)).astype(jnp.float32)

    kernel = make_block_kernel(num_heads, hs, T, TQ)

    def const2(shape):
        return pl.BlockSpec(shape, lambda b, qi: (0, 0))

    in_specs = [
        pl.BlockSpec((1, T, E), lambda b, qi: (b, 0, 0)),       # x (full seq per batch)
        const2((1, E)), const2((1, E)),                         # ln1 gamma/beta
        const2((E, 5 * E)),                                     # fused QKV weight bf16
        const2((1, E)), const2((1, E)),                         # mha norm gamma/beta
        pl.BlockSpec(memory_space=pltpu.MemorySpace.SMEM),      # lamb scalar
        const2((1, E)), const2((1, E)),                         # ln2 gamma/beta
        const2((E, 4 * E)), const2((1, 4 * E)),                 # W1^T bf16, b1 f32
        const2((4 * E, E)), const2((1, E)),                     # W2^T bf16, b2 f32
    ]

    flops = B * (10 * T * E * E + 6 * T * T * E + 16 * T * E * E)
    transcendentals = B * 2 * num_heads * T * T
    bytes_accessed = (2 * B * T * E * 4 + 13 * E * E * 2 + 16 * E * 4)
    cost = pl.CostEstimate(flops=int(flops),
                           transcendentals=int(transcendentals),
                           bytes_accessed=int(bytes_accessed))

    return pl.pallas_call(
        kernel,
        out_shape=jax.ShapeDtypeStruct((B, T, E), jnp.float32),
        grid_spec=pltpu.PrefetchScalarGridSpec(
            num_scalar_prefetch=0,
            grid=(B, NQ),
            in_specs=in_specs,
            out_specs=pl.BlockSpec((1, TQ, E), lambda b, qi: (b, qi, 0)),
            scratch_shapes=[
                pltpu.VMEM((T, 5 * E), jnp.bfloat16),   # cached fused projections
                pltpu.VMEM((TQ, E), jnp.float32),       # per-head output assembly
            ],
        ),
        compiler_params=pltpu.CompilerParams(
            dimension_semantics=("parallel", "arbitrary"),
            vmem_limit_bytes=48 * 1024 * 1024,
        ),
        cost_estimate=cost,
    )(
        x,
        params["ln1_g"], params["ln1_b"],
        wfused,
        params["norm_g"], params["norm_b"],
        lamb,
        params["ln2_g"], params["ln2_b"],
        w1t, params["b1"], w2t, params["b2"],
    )


def init_params(key, E, num_heads, lambda_init=0.8):
    hs = E // num_heads
    keys = jax.random.split(key, 10)
    s_head = 1.0 / (E ** 0.5)
    return {
        "ln1_g": jnp.ones((1, E), jnp.float32),
        "ln1_b": jnp.zeros((1, E), jnp.float32),
        # per-head projection weights, stored as (H, E, hs) = W^T per head
        "wq1": jax.random.normal(keys[0], (num_heads, E, hs), jnp.float32) * s_head,
        "wk1": jax.random.normal(keys[1], (num_heads, E, hs), jnp.float32) * s_head,
        "wq2": jax.random.normal(keys[2], (num_heads, E, hs), jnp.float32) * s_head,
        "wk2": jax.random.normal(keys[3], (num_heads, E, hs), jnp.float32) * s_head,
        "wv":  jax.random.normal(keys[4], (num_heads, E, hs), jnp.float32) * s_head,
        "norm_g": jnp.ones((1, E), jnp.float32),
        "norm_b": jnp.zeros((1, E), jnp.float32),
        "lamb": jnp.full((1,), lambda_init, jnp.float32),
        "ln2_g": jnp.ones((1, E), jnp.float32),
        "ln2_b": jnp.zeros((1, E), jnp.float32),
        "w1t": jax.random.normal(keys[5], (E, 4 * E), jnp.float32) * s_head,
        "b1":  jax.random.normal(keys[6], (1, 4 * E), jnp.float32) * 0.01,
        "w2t": jax.random.normal(keys[7], (4 * E, E), jnp.float32) * (1.0 / ((4 * E) ** 0.5)),
        "b2":  jax.random.normal(keys[8], (1, E), jnp.float32) * 0.01,
    }


def reference_forward(x, p, num_heads):
    """Pure-f32 plain-JAX reference (exact module semantics)."""
    E = x.shape[-1]
    hs = E // num_heads
    lamb = p["lamb"][0]
    h = _layernorm(x, p["ln1_g"][0], p["ln1_b"][0])
    outs = []
    for hi in range(num_heads):
        q1 = h @ p["wq1"][hi]; k1 = h @ p["wk1"][hi]
        q2 = h @ p["wq2"][hi]; k2 = h @ p["wk2"][hi]
        v = h @ p["wv"][hi]
        s1 = jnp.einsum("btd,bsd->bts", q1, k1) * hs ** -0.5
        s2 = jnp.einsum("btd,bsd->bts", q2, k2) * hs ** -0.5
        wei = jax.nn.softmax(s1, -1) - lamb * jax.nn.softmax(s2, -1)
        outs.append(jnp.einsum("bts,bsd->btd", wei, v))
    sa = jnp.concatenate(outs, axis=-1)
    sa = _layernorm(sa, p["norm_g"][0], p["norm_b"][0])
    x1 = x + (1.0 - lamb) * sa
    h2 = _layernorm(x1, p["ln2_g"][0], p["ln2_b"][0])
    ff = jnp.maximum(h2 @ p["w1t"] + p["b1"][0], 0.0) @ p["w2t"] + p["b2"][0]
    return x1 + ff


def reference_forward_bf16(x, p, num_heads):
    """Plain-JAX reference that mirrors the kernel's bf16 matmul boundaries."""
    E = x.shape[-1]
    hs = E // num_heads
    lamb = p["lamb"][0]
    bf16 = jnp.bfloat16
    wfused = build_fused_qkv(p, num_heads)
    h = _layernorm(x, p["ln1_g"][0], p["ln1_b"][0])
    proj = jnp.einsum("bte,ef->btf", h.astype(bf16), wfused,
                      preferred_element_type=jnp.float32).astype(bf16)
    outs = []
    for hi in range(num_heads):
        c0 = hi * hs
        q1 = proj[..., 0 * E + c0: 0 * E + c0 + hs]
        k1 = proj[..., 1 * E + c0: 1 * E + c0 + hs]
        q2 = proj[..., 2 * E + c0: 2 * E + c0 + hs]
        k2 = proj[..., 3 * E + c0: 3 * E + c0 + hs]
        v = proj[..., 4 * E + c0: 4 * E + c0 + hs]
        s1 = jnp.einsum("btd,bsd->bts", q1, k1, preferred_element_type=jnp.float32)
        s2 = jnp.einsum("btd,bsd->bts", q2, k2, preferred_element_type=jnp.float32)
        wei = (jax.nn.softmax(s1, -1) - lamb * jax.nn.softmax(s2, -1)).astype(bf16)
        outs.append(jnp.einsum("bts,bsd->btd", wei, v,
                               preferred_element_type=jnp.float32))
    sa = jnp.concatenate(outs, axis=-1)
    sa = _layernorm(sa, p["norm_g"][0], p["norm_b"][0])
    x1 = x + (1.0 - lamb) * sa
    h2 = _layernorm(x1, p["ln2_g"][0], p["ln2_b"][0])
    ff = jnp.einsum("bte,ef->btf", h2.astype(bf16), p["w1t"].astype(bf16),
                    preferred_element_type=jnp.float32) + p["b1"][0]
    ff = jnp.maximum(ff, 0.0)
    ff = jnp.einsum("btf,fe->bte", ff.astype(bf16), p["w2t"].astype(bf16),
                    preferred_element_type=jnp.float32) + p["b2"][0]
    return x1 + ff


if __name__ == "__main__":
    B, T, E, H = 2, 8, 32, 4
    key = jax.random.PRNGKey(0)
    kx, kp = jax.random.split(key)
    x = jax.random.normal(kx, (B, T, E), jnp.float32)
    params = init_params(kp, E, H)

    out = jax.block_until_ready(block_forward(x, params, H))
    assert out.shape == (B, T, E)

    ref_bf = reference_forward_bf16(x, params, H)
    ref_f32 = reference_forward(x, params, H)
    assert jnp.allclose(out, ref_bf, atol=5e-2, rtol=5e-2), "mismatch vs bf16-matched reference"
    assert jnp.allclose(out, ref_f32, atol=1.5e-1, rtol=1.5e-1), "mismatch vs f32 reference"

    print("KERNEL_OK")
</pallas_src>

<mosaic_0001>
module attributes {stable_mosaic.version = 11 : i64} {
  func.func @block_kernel(%arg0: i32, %arg1: i32, %arg2: memref<1x8x32xf32, #tpu.memory_space<vmem>>, %arg3: memref<1x32xf32, #tpu.memory_space<vmem>>, %arg4: memref<1x32xf32, #tpu.memory_space<vmem>>, %arg5: memref<32x160xbf16, #tpu.memory_space<vmem>>, %arg6: memref<1x32xf32, #tpu.memory_space<vmem>>, %arg7: memref<1x32xf32, #tpu.memory_space<vmem>>, %arg8: memref<1xf32, #tpu.memory_space<smem>>, %arg9: memref<1x32xf32, #tpu.memory_space<vmem>>, %arg10: memref<1x32xf32, #tpu.memory_space<vmem>>, %arg11: memref<32x128xbf16, #tpu.memory_space<vmem>>, %arg12: memref<1x128xf32, #tpu.memory_space<vmem>>, %arg13: memref<128x32xbf16, #tpu.memory_space<vmem>>, %arg14: memref<1x32xf32, #tpu.memory_space<vmem>>, %arg15: memref<1x8x32xf32, #tpu.memory_space<vmem>>, %arg16: memref<8x160xbf16, #tpu.memory_space<vmem>>, %arg17: memref<8x32xf32, #tpu.memory_space<vmem>>) attributes {dimension_semantics = [#tpu.dimension_semantics<parallel>, #tpu.dimension_semantics<arbitrary>], iteration_bounds = array<i64: 2, 1>, scalar_prefetch = 0 : i64, scratch_operands = 2 : i64, tpu.core_type = #tpu.core_type<tc>, window_params = [{transform_indices = @transform_0, window_bounds = array<i64: 1, 8, 32>}, {pipeline_mode = #tpu.pipeline_mode<synchronous>, transform_indices = @transform_1, window_bounds = array<i64: 1, 32>}, {pipeline_mode = #tpu.pipeline_mode<synchronous>, transform_indices = @transform_2, window_bounds = array<i64: 1, 32>}, {pipeline_mode = #tpu.pipeline_mode<synchronous>, transform_indices = @transform_3, window_bounds = array<i64: 32, 160>}, {pipeline_mode = #tpu.pipeline_mode<synchronous>, transform_indices = @transform_4, window_bounds = array<i64: 1, 32>}, {pipeline_mode = #tpu.pipeline_mode<synchronous>, transform_indices = @transform_5, window_bounds = array<i64: 1, 32>}, {transform_indices = @transform_6, window_bounds = array<i64: 1>}, {pipeline_mode = #tpu.pipeline_mode<synchronous>, transform_indices = @transform_7, window_bounds = array<i64: 1, 32>}, {pipeline_mode = #tpu.pipeline_mode<synchronous>, transform_indices = @transform_8, window_bounds = array<i64: 1, 32>}, {pipeline_mode = #tpu.pipeline_mode<synchronous>, transform_indices = @transform_9, window_bounds = array<i64: 32, 128>}, {pipeline_mode = #tpu.pipeline_mode<synchronous>, transform_indices = @transform_10, window_bounds = array<i64: 1, 128>}, {pipeline_mode = #tpu.pipeline_mode<synchronous>, transform_indices = @transform_11, window_bounds = array<i64: 128, 32>}, {pipeline_mode = #tpu.pipeline_mode<synchronous>, transform_indices = @transform_12, window_bounds = array<i64: 1, 32>}, {transform_indices = @transform_13, window_bounds = array<i64: 1, 8, 32>}]} {
    %c0 = arith.constant 0 : index
    %0 = memref.load %arg8[%c0] : memref<1xf32, #tpu.memory_space<smem>>
    %c0_i32 = arith.constant 0 : i32
    %1 = arith.cmpi eq, %arg1, %c0_i32 : i32
    %2 = arith.extui %1 : i1 to i32
    %c0_i32_0 = arith.constant 0 : i32
    %3 = arith.cmpi ne, %2, %c0_i32_0 : i32
    scf.if %3 {
      %c0_86 = arith.constant 0 : index
      %c0_87 = arith.constant 0 : index
      %c0_88 = arith.constant 0 : index
      %232 = vector.load %arg2[%c0_86, %c0_87, %c0_88] : memref<1x8x32xf32, #tpu.memory_space<vmem>>, vector<1x8x32xf32>
      %233 = vector.shape_cast %232 : vector<1x8x32xf32> to vector<8x32xf32>
      %c0_89 = arith.constant 0 : index
      %c0_90 = arith.constant 0 : index
      %234 = vector.load %arg3[%c0_89, %c0_90] : memref<1x32xf32, #tpu.memory_space<vmem>>, vector<1x32xf32>
      %235 = vector.shape_cast %234 : vector<1x32xf32> to vector<32xf32>
      %c0_91 = arith.constant 0 : index
      %c0_92 = arith.constant 0 : index
      %236 = vector.load %arg4[%c0_91, %c0_92] : memref<1x32xf32, #tpu.memory_space<vmem>>, vector<1x32xf32>
      %237 = vector.shape_cast %236 : vector<1x32xf32> to vector<32xf32>
      %cst_93 = arith.constant dense<0.000000e+00> : vector<8xf32>
      %238 = vector.multi_reduction <add>, %233, %cst_93 [1] : vector<8x32xf32> to vector<8xf32>
      %239 = vector.shape_cast %238 : vector<8xf32> to vector<8x1xf32>
      %cst_94 = arith.constant 3.200000e+01 : f32
      %240 = vector.broadcast %cst_94 : f32 to vector<8x1xf32>
      %241 = arith.divf %239, %240 : vector<8x1xf32>
      %242 = vector.broadcast %241 : vector<8x1xf32> to vector<8x32xf32>
      %243 = arith.subf %233, %242 : vector<8x32xf32>
      %244 = arith.mulf %243, %243 : vector<8x32xf32>
      %cst_95 = arith.constant dense<0.000000e+00> : vector<8xf32>
      %245 = vector.multi_reduction <add>, %244, %cst_95 [1] : vector<8x32xf32> to vector<8xf32>
      %246 = vector.shape_cast %245 : vector<8xf32> to vector<8x1xf32>
      %cst_96 = arith.constant 3.200000e+01 : f32
      %247 = vector.broadcast %cst_96 : f32 to vector<8x1xf32>
      %248 = arith.divf %246, %247 : vector<8x1xf32>
      %249 = vector.broadcast %241 : vector<8x1xf32> to vector<8x32xf32>
      %250 = arith.subf %233, %249 : vector<8x32xf32>
      %cst_97 = arith.constant 9.99999974E-6 : f32
      %251 = vector.broadcast %cst_97 : f32 to vector<8x1xf32>
      %252 = arith.addf %248, %251 : vector<8x1xf32>
      %253 = math.rsqrt %252 : vector<8x1xf32>
      %254 = vector.broadcast %253 : vector<8x1xf32> to vector<8x32xf32>
      %255 = arith.mulf %250, %254 : vector<8x32xf32>
      %256 = vector.shape_cast %235 : vector<32xf32> to vector<1x32xf32>
      %257 = vector.broadcast %256 : vector<1x32xf32> to vector<8x32xf32>
      %258 = arith.mulf %255, %257 : vector<8x32xf32>
      %259 = vector.shape_cast %237 : vector<32xf32> to vector<1x32xf32>
      %260 = vector.broadcast %259 : vector<1x32xf32> to vector<8x32xf32>
      %261 = arith.addf %258, %260 : vector<8x32xf32>
      %262 = arith.truncf %261 : vector<8x32xf32> to vector<8x32xbf16>
      %c0_98 = arith.constant 0 : index
      %c0_99 = arith.constant 0 : index
      %263 = vector.load %arg5[%c0_98, %c0_99] : memref<32x160xbf16, #tpu.memory_space<vmem>>, vector<32x160xbf16>
      %cst_100 = arith.constant dense<0.000000e+00> : vector<8x160xf32>
      %264 = tpu.matmul %262, %263, %cst_100 {dimension_numbers = #tpu.dot_dimension_numbers<[1], [0], [0], [1], [0, 0, 1, 1], [], []>} : vector<8x32xbf16>, vector<32x160xbf16>, vector<8x160xf32> -> vector<8x160xf32>
      %265 = arith.truncf %264 : vector<8x160xf32> to vector<8x160xbf16>
      %c0_101 = arith.constant 0 : index
      %c0_102 = arith.constant 0 : index
      %266 = vector.load %arg16[%c0_101, %c0_102] : memref<8x160xbf16, #tpu.memory_space<vmem>>, vector<8x160xbf16>
      tpu.vector_store %arg16[%c0_101, %c0_102], %265 {strides = array<i32>} : memref<8x160xbf16, #tpu.memory_space<vmem>>, vector<8x160xbf16>,
    } else {
    }
    %c8_i32 = arith.constant 8 : i32
    %4 = arith.muli %arg1, %c8_i32 : i32
    %5 = tpu.assume_multiple %4, 8 : i32
    %c0_1 = arith.constant 0 : index
    %6 = arith.index_cast %5 : i32 to index
    %c0_2 = arith.constant 0 : index
    %7 = vector.load %arg2[%c0_1, %6, %c0_2] : memref<1x8x32xf32, #tpu.memory_space<vmem>>, vector<1x8x32xf32>
    %8 = vector.shape_cast %7 : vector<1x8x32xf32> to vector<8x32xf32>
    %9 = arith.index_cast %5 : i32 to index
    %c0_3 = arith.constant 0 : index
    %10 = vector.load %arg16[%9, %c0_3] : memref<8x160xbf16, #tpu.memory_space<vmem>>, vector<8x8xbf16>
    %c0_4 = arith.constant 0 : index
    %c32 = arith.constant 32 : index
    %11 = vector.load %arg16[%c0_4, %c32] : memref<8x160xbf16, #tpu.memory_space<vmem>>, vector<8x8xbf16>
    %12 = arith.index_cast %5 : i32 to index
    %c64 = arith.constant 64 : index
    %13 = vector.load %arg16[%12, %c64] : memref<8x160xbf16, #tpu.memory_space<vmem>>, vector<8x8xbf16>
    %c0_5 = arith.constant 0 : index
    %c96 = arith.constant 96 : index
    %14 = vector.load %arg16[%c0_5, %c96] : memref<8x160xbf16, #tpu.memory_space<vmem>>, vector<8x8xbf16>
    %c0_6 = arith.constant 0 : index
    %c128 = arith.constant 128 : index
    %15 = vector.load %arg16[%c0_6, %c128] : memref<8x160xbf16, #tpu.memory_space<vmem>>, vector<8x8xbf16>
    %cst = arith.constant dense<0.000000e+00> : vector<8x8xf32>
    %16 = tpu.matmul %10, %11, %cst {dimension_numbers = #tpu.dot_dimension_numbers<[1], [1], [0], [0], [0, 0, 1, 0], [], []>} : vector<8x8xbf16>, vector<8x8xbf16>, vector<8x8xf32> -> vector<8x8xf32>
    %cst_7 = arith.constant dense<0.000000e+00> : vector<8x8xf32>
    %17 = tpu.matmul %13, %14, %cst_7 {dimension_numbers = #tpu.dot_dimension_numbers<[1], [1], [0], [0], [0, 0, 1, 0], [], []>} : vector<8x8xbf16>, vector<8x8xbf16>, vector<8x8xf32> -> vector<8x8xf32>
    %cst_8 = arith.constant dense<0xFF800000> : vector<8xf32>
    %18 = vector.multi_reduction <maximumf>, %16, %cst_8 [1] : vector<8x8xf32> to vector<8xf32>
    %19 = vector.shape_cast %18 : vector<8xf32> to vector<8x1xf32>
    %20 = vector.broadcast %19 : vector<8x1xf32> to vector<8x8xf32>
    %21 = arith.subf %16, %20 : vector<8x8xf32>
    %22 = math.exp %21 : vector<8x8xf32>
    %cst_9 = arith.constant dense<0.000000e+00> : vector<8xf32>
    %23 = vector.multi_reduction <add>, %22, %cst_9 [1] : vector<8x8xf32> to vector<8xf32>
    %24 = vector.shape_cast %23 : vector<8xf32> to vector<8x1xf32>
    %25 = tpu.reciprocal %24 {approx = true} : vector<8x1xf32> -> vector<8x1xf32>
    %26 = vector.broadcast %25 : vector<8x1xf32> to vector<8x8xf32>
    %27 = arith.mulf %22, %26 : vector<8x8xf32>
    %cst_10 = arith.constant dense<0xFF800000> : vector<8xf32>
    %28 = vector.multi_reduction <maximumf>, %17, %cst_10 [1] : vector<8x8xf32> to vector<8xf32>
    %29 = vector.shape_cast %28 : vector<8xf32> to vector<8x1xf32>
    %30 = vector.broadcast %29 : vector<8x1xf32> to vector<8x8xf32>
    %31 = arith.subf %17, %30 : vector<8x8xf32>
    %32 = math.exp %31 : vector<8x8xf32>
    %cst_11 = arith.constant dense<0.000000e+00> : vector<8xf32>
    %33 = vector.multi_reduction <add>, %32, %cst_11 [1] : vector<8x8xf32> to vector<8xf32>
    %34 = vector.shape_cast %33 : vector<8xf32> to vector<8x1xf32>
    %35 = tpu.reciprocal %34 {approx = true} : vector<8x1xf32> -> vector<8x1xf32>
    %36 = vector.broadcast %35 : vector<8x1xf32> to vector<8x8xf32>
    %37 = arith.mulf %32, %36 : vector<8x8xf32>
    %38 = vector.broadcast %0 : f32 to vector<8x8xf32>
    %39 = arith.mulf %38, %37 : vector<8x8xf32>
    %40 = arith.subf %27, %39 : vector<8x8xf32>
    %41 = arith.truncf %40 : vector<8x8xf32> to vector<8x8xbf16>
    %cst_12 = arith.constant dense<0.000000e+00> : vector<8x8xf32>
    %42 = tpu.matmul %41, %15, %cst_12 {dimension_numbers = #tpu.dot_dimension_numbers<[1], [0], [0], [1], [0, 0, 1, 1], [], []>} : vector<8x8xbf16>, vector<8x8xbf16>, vector<8x8xf32> -> vector<8x8xf32>
    %c0_13 = arith.constant 0 : index
    %c0_14 = arith.constant 0 : index
    %43 = vector.load %arg17[%c0_13, %c0_14] : memref<8x32xf32, #tpu.memory_space<vmem>>, vector<8x8xf32>
    tpu.vector_store %arg17[%c0_13, %c0_14], %42 {strides = array<i32>} : memref<8x32xf32, #tpu.memory_space<vmem>>, vector<8x8xf32>,
    %44 = arith.index_cast %5 : i32 to index
    %c8 = arith.constant 8 : index
    %45 = vector.load %arg16[%44, %c8] : memref<8x160xbf16, #tpu.memory_space<vmem>>, vector<8x8xbf16>
    %c0_15 = arith.constant 0 : index
    %c40 = arith.constant 40 : index
    %46 = vector.load %arg16[%c0_15, %c40] : memref<8x160xbf16, #tpu.memory_space<vmem>>, vector<8x8xbf16>
    %47 = arith.index_cast %5 : i32 to index
    %c72 = arith.constant 72 : index
    %48 = vector.load %arg16[%47, %c72] : memref<8x160xbf16, #tpu.memory_space<vmem>>, vector<8x8xbf16>
    %c0_16 = arith.constant 0 : index
    %c104 = arith.constant 104 : index
    %49 = vector.load %arg16[%c0_16, %c104] : memref<8x160xbf16, #tpu.memory_space<vmem>>, vector<8x8xbf16>
    %c0_17 = arith.constant 0 : index
    %c136 = arith.constant 136 : index
    %50 = vector.load %arg16[%c0_17, %c136] : memref<8x160xbf16, #tpu.memory_space<vmem>>, vector<8x8xbf16>
    %cst_18 = arith.constant dense<0.000000e+00> : vector<8x8xf32>
    %51 = tpu.matmul %45, %46, %cst_18 {dimension_numbers = #tpu.dot_dimension_numbers<[1], [1], [0], [0], [0, 0, 1, 0], [], []>} : vector<8x8xbf16>, vector<8x8xbf16>, vector<8x8xf32> -> vector<8x8xf32>
    %cst_19 = arith.constant dense<0.000000e+00> : vector<8x8xf32>
    %52 = tpu.matmul %48, %49, %cst_19 {dimension_numbers = #tpu.dot_dimension_numbers<[1], [1], [0], [0], [0, 0, 1, 0], [], []>} : vector<8x8xbf16>, vector<8x8xbf16>, vector<8x8xf32> -> vector<8x8xf32>
    %cst_20 = arith.constant dense<0xFF800000> : vector<8xf32>
    %53 = vector.multi_reduction <maximumf>, %51, %cst_20 [1] : vector<8x8xf32> to vector<8xf32>
    %54 = vector.shape_cast %53 : vector<8xf32> to vector<8x1xf32>
    %55 = vector.broadcast %54 : vector<8x1xf32> to vector<8x8xf32>
    %56 = arith.subf %51, %55 : vector<8x8xf32>
    %57 = math.exp %56 : vector<8x8xf32>
    %cst_21 = arith.constant dense<0.000000e+00> : vector<8xf32>
    %58 = vector.multi_reduction <add>, %57, %cst_21 [1] : vector<8x8xf32> to vector<8xf32>
    %59 = vector.shape_cast %58 : vector<8xf32> to vector<8x1xf32>
    %60 = tpu.reciprocal %59 {approx = true} : vector<8x1xf32> -> vector<8x1xf32>
    %61 = vector.broadcast %60 : vector<8x1xf32> to vector<8x8xf32>
    %62 = arith.mulf %57, %61 : vector<8x8xf32>
    %cst_22 = arith.constant dense<0xFF800000> : vector<8xf32>
    %63 = vector.multi_reduction <maximumf>, %52, %cst_22 [1] : vector<8x8xf32> to vector<8xf32>
    %64 = vector.shape_cast %63 : vector<8xf32> to vector<8x1xf32>
    %65 = vector.broadcast %64 : vector<8x1xf32> to vector<8x8xf32>
    %66 = arith.subf %52, %65 : vector<8x8xf32>
    %67 = math.exp %66 : vector<8x8xf32>
    %cst_23 = arith.constant dense<0.000000e+00> : vector<8xf32>
    %68 = vector.multi_reduction <add>, %67, %cst_23 [1] : vector<8x8xf32> to vector<8xf32>
    %69 = vector.shape_cast %68 : vector<8xf32> to vector<8x1xf32>
    %70 = tpu.reciprocal %69 {approx = true} : vector<8x1xf32> -> vector<8x1xf32>
    %71 = vector.broadcast %70 : vector<8x1xf32> to vector<8x8xf32>
    %72 = arith.mulf %67, %71 : vector<8x8xf32>
    %73 = vector.broadcast %0 : f32 to vector<8x8xf32>
    %74 = arith.mulf %73, %72 : vector<8x8xf32>
    %75 = arith.subf %62, %74 : vector<8x8xf32>
    %76 = arith.truncf %75 : vector<8x8xf32> to vector<8x8xbf16>
    %cst_24 = arith.constant dense<0.000000e+00> : vector<8x8xf32>
    %77 = tpu.matmul %76, %50, %cst_24 {dimension_numbers = #tpu.dot_dimension_numbers<[1], [0], [0], [1], [0, 0, 1, 1], [], []>} : vector<8x8xbf16>, vector<8x8xbf16>, vector<8x8xf32> -> vector<8x8xf32>
    %c0_25 = arith.constant 0 : index
    %c8_26 = arith.constant 8 : index
    %78 = vector.load %arg17[%c0_25, %c8_26] : memref<8x32xf32, #tpu.memory_space<vmem>>, vector<8x8xf32>
    tpu.vector_store %arg17[%c0_25, %c8_26], %77 {strides = array<i32>} : memref<8x32xf32, #tpu.memory_space<vmem>>, vector<8x8xf32>,
    %79 = arith.index_cast %5 : i32 to index
    %c16 = arith.constant 16 : index
    %80 = vector.load %arg16[%79, %c16] : memref<8x160xbf16, #tpu.memory_space<vmem>>, vector<8x8xbf16>
    %c0_27 = arith.constant 0 : index
    %c48 = arith.constant 48 : index
    %81 = vector.load %arg16[%c0_27, %c48] : memref<8x160xbf16, #tpu.memory_space<vmem>>, vector<8x8xbf16>
    %82 = arith.index_cast %5 : i32 to index
    %c80 = arith.constant 80 : index
    %83 = vector.load %arg16[%82, %c80] : memref<8x160xbf16, #tpu.memory_space<vmem>>, vector<8x8xbf16>
    %c0_28 = arith.constant 0 : index
    %c112 = arith.constant 112 : index
    %84 = vector.load %arg16[%c0_28, %c112] : memref<8x160xbf16, #tpu.memory_space<vmem>>, vector<8x8xbf16>
    %c0_29 = arith.constant 0 : index
    %c144 = arith.constant 144 : index
    %85 = vector.load %arg16[%c0_29, %c144] : memref<8x160xbf16, #tpu.memory_space<vmem>>, vector<8x8xbf16>
    %cst_30 = arith.constant dense<0.000000e+00> : vector<8x8xf32>
    %86 = tpu.matmul %80, %81, %cst_30 {dimension_numbers = #tpu.dot_dimension_numbers<[1], [1], [0], [0], [0, 0, 1, 0], [], []>} : vector<8x8xbf16>, vector<8x8xbf16>, vector<8x8xf32> -> vector<8x8xf32>
    %cst_31 = arith.constant dense<0.000000e+00> : vector<8x8xf32>
    %87 = tpu.matmul %83, %84, %cst_31 {dimension_numbers = #tpu.dot_dimension_numbers<[1], [1], [0], [0], [0, 0, 1, 0], [], []>} : vector<8x8xbf16>, vector<8x8xbf16>, vector<8x8xf32> -> vector<8x8xf32>
    %cst_32 = arith.constant dense<0xFF800000> : vector<8xf32>
    %88 = vector.multi_reduction <maximumf>, %86, %cst_32 [1] : vector<8x8xf32> to vector<8xf32>
    %89 = vector.shape_cast %88 : vector<8xf32> to vector<8x1xf32>
    %90 = vector.broadcast %89 : vector<8x1xf32> to vector<8x8xf32>
    %91 = arith.subf %86, %90 : vector<8x8xf32>
    %92 = math.exp %91 : vector<8x8xf32>
    %cst_33 = arith.constant dense<0.000000e+00> : vector<8xf32>
    %93 = vector.multi_reduction <add>, %92, %cst_33 [1] : vector<8x8xf32> to vector<8xf32>
    %94 = vector.shape_cast %93 : vector<8xf32> to vector<8x1xf32>
    %95 = tpu.reciprocal %94 {approx = true} : vector<8x1xf32> -> vector<8x1xf32>
    %96 = vector.broadcast %95 : vector<8x1xf32> to vector<8x8xf32>
    %97 = arith.mulf %92, %96 : vector<8x8xf32>
    %cst_34 = arith.constant dense<0xFF800000> : vector<8xf32>
    %98 = vector.multi_reduction <maximumf>, %87, %cst_34 [1] : vector<8x8xf32> to vector<8xf32>
    %99 = vector.shape_cast %98 : vector<8xf32> to vector<8x1xf32>
    %100 = vector.broadcast %99 : vector<8x1xf32> to vector<8x8xf32>
    %101 = arith.subf %87, %100 : vector<8x8xf32>
    %102 = math.exp %101 : vector<8x8xf32>
    %cst_35 = arith.constant dense<0.000000e+00> : vector<8xf32>
    %103 = vector.multi_reduction <add>, %102, %cst_35 [1] : vector<8x8xf32> to vector<8xf32>
    %104 = vector.shape_cast %103 : vector<8xf32> to vector<8x1xf32>
    %105 = tpu.reciprocal %104 {approx = true} : vector<8x1xf32> -> vector<8x1xf32>
    %106 = vector.broadcast %105 : vector<8x1xf32> to vector<8x8xf32>
    %107 = arith.mulf %102, %106 : vector<8x8xf32>
    %108 = vector.broadcast %0 : f32 to vector<8x8xf32>
    %109 = arith.mulf %108, %107 : vector<8x8xf32>
    %110 = arith.subf %97, %109 : vector<8x8xf32>
    %111 = arith.truncf %110 : vector<8x8xf32> to vector<8x8xbf16>
    %cst_36 = arith.constant dense<0.000000e+00> : vector<8x8xf32>
    %112 = tpu.matmul %111, %85, %cst_36 {dimension_numbers = #tpu.dot_dimension_numbers<[1], [0], [0], [1], [0, 0, 1, 1], [], []>} : vector<8x8xbf16>, vector<8x8xbf16>, vector<8x8xf32> -> vector<8x8xf32>
    %c0_37 = arith.constant 0 : index
    %c16_38 = arith.constant 16 : index
    %113 = vector.load %arg17[%c0_37, %c16_38] : memref<8x32xf32, #tpu.memory_space<vmem>>, vector<8x8xf32>
    tpu.vector_store %arg17[%c0_37, %c16_38], %112 {strides = array<i32>} : memref<8x32xf32, #tpu.memory_space<vmem>>, vector<8x8xf32>,
    %114 = arith.index_cast %5 : i32 to index
    %c24 = arith.constant 24 : index
    %115 = vector.load %arg16[%114, %c24] : memref<8x160xbf16, #tpu.memory_space<vmem>>, vector<8x8xbf16>
    %c0_39 = arith.constant 0 : index
    %c56 = arith.constant 56 : index
    %116 = vector.load %arg16[%c0_39, %c56] : memref<8x160xbf16, #tpu.memory_space<vmem>>, vector<8x8xbf16>
    %117 = arith.index_cast %5 : i32 to index
    %c88 = arith.constant 88 : index
    %118 = vector.load %arg16[%117, %c88] : memref<8x160xbf16, #tpu.memory_space<vmem>>, vector<8x8xbf16>
    %c0_40 = arith.constant 0 : index
    %c120 = arith.constant 120 : index
    %119 = vector.load %arg16[%c0_40, %c120] : memref<8x160xbf16, #tpu.memory_space<vmem>>, vector<8x8xbf16>
    %c0_41 = arith.constant 0 : index
    %c152 = arith.constant 152 : index
    %120 = vector.load %arg16[%c0_41, %c152] : memref<8x160xbf16, #tpu.memory_space<vmem>>, vector<8x8xbf16>
    %cst_42 = arith.constant dense<0.000000e+00> : vector<8x8xf32>
    %121 = tpu.matmul %115, %116, %cst_42 {dimension_numbers = #tpu.dot_dimension_numbers<[1], [1], [0], [0], [0, 0, 1, 0], [], []>} : vector<8x8xbf16>, vector<8x8xbf16>, vector<8x8xf32> -> vector<8x8xf32>
    %cst_43 = arith.constant dense<0.000000e+00> : vector<8x8xf32>
    %122 = tpu.matmul %118, %119, %cst_43 {dimension_numbers = #tpu.dot_dimension_numbers<[1], [1], [0], [0], [0, 0, 1, 0], [], []>} : vector<8x8xbf16>, vector<8x8xbf16>, vector<8x8xf32> -> vector<8x8xf32>
    %cst_44 = arith.constant dense<0xFF800000> : vector<8xf32>
    %123 = vector.multi_reduction <maximumf>, %121, %cst_44 [1] : vector<8x8xf32> to vector<8xf32>
    %124 = vector.shape_cast %123 : vector<8xf32> to vector<8x1xf32>
    %125 = vector.broadcast %124 : vector<8x1xf32> to vector<8x8xf32>
    %126 = arith.subf %121, %125 : vector<8x8xf32>
    %127 = math.exp %126 : vector<8x8xf32>
    %cst_45 = arith.constant dense<0.000000e+00> : vector<8xf32>
    %128 = vector.multi_reduction <add>, %127, %cst_45 [1] : vector<8x8xf32> to vector<8xf32>
    %129 = vector.shape_cast %128 : vector<8xf32> to vector<8x1xf32>
    %130 = tpu.reciprocal %129 {approx = true} : vector<8x1xf32> -> vector<8x1xf32>
    %131 = vector.broadcast %130 : vector<8x1xf32> to vector<8x8xf32>
    %132 = arith.mulf %127, %131 : vector<8x8xf32>
    %cst_46 = arith.constant dense<0xFF800000> : vector<8xf32>
    %133 = vector.multi_reduction <maximumf>, %122, %cst_46 [1] : vector<8x8xf32> to vector<8xf32>
    %134 = vector.shape_cast %133 : vector<8xf32> to vector<8x1xf32>
    %135 = vector.broadcast %134 : vector<8x1xf32> to vector<8x8xf32>
    %136 = arith.subf %122, %135 : vector<8x8xf32>
    %137 = math.exp %136 : vector<8x8xf32>
    %cst_47 = arith.constant dense<0.000000e+00> : vector<8xf32>
    %138 = vector.multi_reduction <add>, %137, %cst_47 [1] : vector<8x8xf32> to vector<8xf32>
    %139 = vector.shape_cast %138 : vector<8xf32> to vector<8x1xf32>
    %140 = tpu.reciprocal %139 {approx = true} : vector<8x1xf32> -> vector<8x1xf32>
    %141 = vector.broadcast %140 : vector<8x1xf32> to vector<8x8xf32>
    %142 = arith.mulf %137, %141 : vector<8x8xf32>
    %143 = vector.broadcast %0 : f32 to vector<8x8xf32>
    %144 = arith.mulf %143, %142 : vector<8x8xf32>
    %145 = arith.subf %132, %144 : vector<8x8xf32>
    %146 = arith.truncf %145 : vector<8x8xf32> to vector<8x8xbf16>
    %cst_48 = arith.constant dense<0.000000e+00> : vector<8x8xf32>
    %147 = tpu.matmul %146, %120, %cst_48 {dimension_numbers = #tpu.dot_dimension_numbers<[1], [0], [0], [1], [0, 0, 1, 1], [], []>} : vector<8x8xbf16>, vector<8x8xbf16>, vector<8x8xf32> -> vector<8x8xf32>
    %c0_49 = arith.constant 0 : index
    %c24_50 = arith.constant 24 : index
    %148 = vector.load %arg17[%c0_49, %c24_50] : memref<8x32xf32, #tpu.memory_space<vmem>>, vector<8x8xf32>
    tpu.vector_store %arg17[%c0_49, %c24_50], %147 {strides = array<i32>} : memref<8x32xf32, #tpu.memory_space<vmem>>, vector<8x8xf32>,
    %c0_51 = arith.constant 0 : index
    %c0_52 = arith.constant 0 : index
    %149 = vector.load %arg17[%c0_51, %c0_52] : memref<8x32xf32, #tpu.memory_space<vmem>>, vector<8x32xf32>
    %c0_53 = arith.constant 0 : index
    %c0_54 = arith.constant 0 : index
    %150 = vector.load %arg6[%c0_53, %c0_54] : memref<1x32xf32, #tpu.memory_space<vmem>>, vector<1x32xf32>
    %151 = vector.shape_cast %150 : vector<1x32xf32> to vector<32xf32>
    %c0_55 = arith.constant 0 : index
    %c0_56 = arith.constant 0 : index
    %152 = vector.load %arg7[%c0_55, %c0_56] : memref<1x32xf32, #tpu.memory_space<vmem>>, vector<1x32xf32>
    %153 = vector.shape_cast %152 : vector<1x32xf32> to vector<32xf32>
    %cst_57 = arith.constant dense<0.000000e+00> : vector<8xf32>
    %154 = vector.multi_reduction <add>, %149, %cst_57 [1] : vector<8x32xf32> to vector<8xf32>
    %155 = vector.shape_cast %154 : vector<8xf32> to vector<8x1xf32>
    %cst_58 = arith.constant 3.200000e+01 : f32
    %156 = vector.broadcast %cst_58 : f32 to vector<8x1xf32>
    %157 = arith.divf %155, %156 : vector<8x1xf32>
    %158 = vector.broadcast %157 : vector<8x1xf32> to vector<8x32xf32>
    %159 = arith.subf %149, %158 : vector<8x32xf32>
    %160 = arith.mulf %159, %159 : vector<8x32xf32>
    %cst_59 = arith.constant dense<0.000000e+00> : vector<8xf32>
    %161 = vector.multi_reduction <add>, %160, %cst_59 [1] : vector<8x32xf32> to vector<8xf32>
    %162 = vector.shape_cast %161 : vector<8xf32> to vector<8x1xf32>
    %cst_60 = arith.constant 3.200000e+01 : f32
    %163 = vector.broadcast %cst_60 : f32 to vector<8x1xf32>
    %164 = arith.divf %162, %163 : vector<8x1xf32>
    %165 = vector.broadcast %157 : vector<8x1xf32> to vector<8x32xf32>
    %166 = arith.subf %149, %165 : vector<8x32xf32>
    %cst_61 = arith.constant 9.99999974E-6 : f32
    %167 = vector.broadcast %cst_61 : f32 to vector<8x1xf32>
    %168 = arith.addf %164, %167 : vector<8x1xf32>
    %169 = math.rsqrt %168 : vector<8x1xf32>
    %170 = vector.broadcast %169 : vector<8x1xf32> to vector<8x32xf32>
    %171 = arith.mulf %166, %170 : vector<8x32xf32>
    %172 = vector.shape_cast %151 : vector<32xf32> to vector<1x32xf32>
    %173 = vector.broadcast %172 : vector<1x32xf32> to vector<8x32xf32>
    %174 = arith.mulf %171, %173 : vector<8x32xf32>
    %175 = vector.shape_cast %153 : vector<32xf32> to vector<1x32xf32>
    %176 = vector.broadcast %175 : vector<1x32xf32> to vector<8x32xf32>
    %177 = arith.addf %174, %176 : vector<8x32xf32>
    %cst_62 = arith.constant 1.000000e+00 : f32
    %178 = arith.subf %cst_62, %0 : f32
    %179 = vector.broadcast %178 : f32 to vector<8x32xf32>
    %180 = arith.mulf %179, %177 : vector<8x32xf32>
    %181 = arith.addf %8, %180 : vector<8x32xf32>
    %c0_63 = arith.constant 0 : index
    %c0_64 = arith.constant 0 : index
    %182 = vector.load %arg9[%c0_63, %c0_64] : memref<1x32xf32, #tpu.memory_space<vmem>>, vector<1x32xf32>
    %183 = vector.shape_cast %182 : vector<1x32xf32> to vector<32xf32>
    %c0_65 = arith.constant 0 : index
    %c0_66 = arith.constant 0 : index
    %184 = vector.load %arg10[%c0_65, %c0_66] : memref<1x32xf32, #tpu.memory_space<vmem>>, vector<1x32xf32>
    %185 = vector.shape_cast %184 : vector<1x32xf32> to vector<32xf32>
    %cst_67 = arith.constant dense<0.000000e+00> : vector<8xf32>
    %186 = vector.multi_reduction <add>, %181, %cst_67 [1] : vector<8x32xf32> to vector<8xf32>
    %187 = vector.shape_cast %186 : vector<8xf32> to vector<8x1xf32>
    %cst_68 = arith.constant 3.200000e+01 : f32
    %188 = vector.broadcast %cst_68 : f32 to vector<8x1xf32>
    %189 = arith.divf %187, %188 : vector<8x1xf32>
    %190 = vector.broadcast %189 : vector<8x1xf32> to vector<8x32xf32>
    %191 = arith.subf %181, %190 : vector<8x32xf32>
    %192 = arith.mulf %191, %191 : vector<8x32xf32>
    %cst_69 = arith.constant dense<0.000000e+00> : vector<8xf32>
    %193 = vector.multi_reduction <add>, %192, %cst_69 [1] : vector<8x32xf32> to vector<8xf32>
    %194 = vector.shape_cast %193 : vector<8xf32> to vector<8x1xf32>
    %cst_70 = arith.constant 3.200000e+01 : f32
    %195 = vector.broadcast %cst_70 : f32 to vector<8x1xf32>
    %196 = arith.divf %194, %195 : vector<8x1xf32>
    %197 = vector.broadcast %189 : vector<8x1xf32> to vector<8x32xf32>
    %198 = arith.subf %181, %197 : vector<8x32xf32>
    %cst_71 = arith.constant 9.99999974E-6 : f32
    %199 = vector.broadcast %cst_71 : f32 to vector<8x1xf32>
    %200 = arith.addf %196, %199 : vector<8x1xf32>
    %201 = math.rsqrt %200 : vector<8x1xf32>
    %202 = vector.broadcast %201 : vector<8x1xf32> to vector<8x32xf32>
    %203 = arith.mulf %198, %202 : vector<8x32xf32>
    %204 = vector.shape_cast %183 : vector<32xf32> to vector<1x32xf32>
    %205 = vector.broadcast %204 : vector<1x32xf32> to vector<8x32xf32>
    %206 = arith.mulf %203, %205 : vector<8x32xf32>
    %207 = vector.shape_cast %185 : vector<32xf32> to vector<1x32xf32>
    %208 = vector.broadcast %207 : vector<1x32xf32> to vector<8x32xf32>
    %209 = arith.addf %206, %208 : vector<8x32xf32>
    %210 = arith.truncf %209 : vector<8x32xf32> to vector<8x32xbf16>
    %c0_72 = arith.constant 0 : index
    %c0_73 = arith.constant 0 : index
    %211 = vector.load %arg11[%c0_72, %c0_73] : memref<32x128xbf16, #tpu.memory_space<vmem>>, vector<32x128xbf16>
    %cst_74 = arith.constant dense<0.000000e+00> : vector<8x128xf32>
    %212 = tpu.matmul %210, %211, %cst_74 {dimension_numbers = #tpu.dot_dimension_numbers<[1], [0], [0], [1], [0, 0, 1, 1], [], []>} : vector<8x32xbf16>, vector<32x128xbf16>, vector<8x128xf32> -> vector<8x128xf32>
    %c0_75 = arith.constant 0 : index
    %c0_76 = arith.constant 0 : index
    %213 = vector.load %arg12[%c0_75, %c0_76] : memref<1x128xf32, #tpu.memory_space<vmem>>, vector<1x128xf32>
    %214 = vector.shape_cast %213 : vector<1x128xf32> to vector<128xf32>
    %215 = vector.shape_cast %214 : vector<128xf32> to vector<1x128xf32>
    %216 = vector.broadcast %215 : vector<1x128xf32> to vector<8x128xf32>
    %217 = arith.addf %212, %216 : vector<8x128xf32>
    %cst_77 = arith.constant 0.000000e+00 : f32
    %218 = vector.broadcast %cst_77 : f32 to vector<8x128xf32>
    %219 = arith.maximumf %217, %218 : vector<8x128xf32>
    %220 = arith.truncf %219 : vector<8x128xf32> to vector<8x128xbf16>
    %c0_78 = arith.constant 0 : index
    %c0_79 = arith.constant 0 : index
    %221 = vector.load %arg13[%c0_78, %c0_79] : memref<128x32xbf16, #tpu.memory_space<vmem>>, vector<128x32xbf16>
    %cst_80 = arith.constant dense<0.000000e+00> : vector<8x32xf32>
    %222 = tpu.matmul %220, %221, %cst_80 {dimension_numbers = #tpu.dot_dimension_numbers<[1], [0], [0], [1], [0, 0, 1, 1], [], []>} : vector<8x128xbf16>, vector<128x32xbf16>, vector<8x32xf32> -> vector<8x32xf32>
    %c0_81 = arith.constant 0 : index
    %c0_82 = arith.constant 0 : index
    %223 = vector.load %arg14[%c0_81, %c0_82] : memref<1x32xf32, #tpu.memory_space<vmem>>, vector<1x32xf32>
    %224 = vector.shape_cast %223 : vector<1x32xf32> to vector<32xf32>
    %225 = vector.shape_cast %224 : vector<32xf32> to vector<1x32xf32>
    %226 = vector.broadcast %225 : vector<1x32xf32> to vector<8x32xf32>
    %227 = arith.addf %222, %226 : vector<8x32xf32>
    %228 = arith.addf %181, %227 : vector<8x32xf32>
    %c0_83 = arith.constant 0 : index
    %c0_84 = arith.constant 0 : index
    %c0_85 = arith.constant 0 : index
    %229 = vector.load %arg15[%c0_83, %c0_84, %c0_85] : memref<1x8x32xf32, #tpu.memory_space<vmem>>, vector<1x8x32xf32>
    %230 = vector.shape_cast %229 : vector<1x8x32xf32> to vector<8x32xf32>
    %231 = vector.shape_cast %228 : vector<8x32xf32> to vector<1x8x32xf32>
    tpu.vector_store %arg15[%c0_83, %c0_84, %c0_85], %231 {strides = array<i32>} : memref<1x8x32xf32, #tpu.memory_space<vmem>>, vector<1x8x32xf32>,
    return
  }
  func.func @transform_0(%arg0: i32, %arg1: i32) -> (i32, i32, i32) {
    %c0_i32 = arith.constant 0 : i32
    %c0_i32_0 = arith.constant 0 : i32
    %c0_i32_1 = arith.constant 0 : i32
    return %arg0, %c0_i32, %c0_i32_0 : i32, i32, i32
  }
  func.func @transform_1(%arg0: i32, %arg1: i32) -> (i32, i32) {
    %c0_i32 = arith.constant 0 : i32
    %c0_i32_0 = arith.constant 0 : i32
    %c0_i32_1 = arith.constant 0 : i32
    return %c0_i32, %c0_i32_0 : i32, i32
  }
  func.func @transform_2(%arg0: i32, %arg1: i32) -> (i32, i32) {
    %c0_i32 = arith.constant 0 : i32
    %c0_i32_0 = arith.constant 0 : i32
    %c0_i32_1 = arith.constant 0 : i32
    return %c0_i32, %c0_i32_0 : i32, i32
  }
  func.func @transform_3(%arg0: i32, %arg1: i32) -> (i32, i32) {
    %c0_i32 = arith.constant 0 : i32
    %c0_i32_0 = arith.constant 0 : i32
    %c0_i32_1 = arith.constant 0 : i32
    return %c0_i32, %c0_i32_0 : i32, i32
  }
  func.func @transform_4(%arg0: i32, %arg1: i32) -> (i32, i32) {
    %c0_i32 = arith.constant 0 : i32
    %c0_i32_0 = arith.constant 0 : i32
    %c0_i32_1 = arith.constant 0 : i32
    return %c0_i32, %c0_i32_0 : i32, i32
  }
  func.func @transform_5(%arg0: i32, %arg1: i32) -> (i32, i32) {
    %c0_i32 = arith.constant 0 : i32
    %c0_i32_0 = arith.constant 0 : i32
    %c0_i32_1 = arith.constant 0 : i32
    return %c0_i32, %c0_i32_0 : i32, i32
  }
  func.func @transform_6(%arg0: i32, %arg1: i32) -> i32 {
    %c0_i32 = arith.constant 0 : i32
    %c0_i32_0 = arith.constant 0 : i32
    return %c0_i32 : i32
  }
  func.func @transform_7(%arg0: i32, %arg1: i32) -> (i32, i32) {
    %c0_i32 = arith.constant 0 : i32
    %c0_i32_0 = arith.constant 0 : i32
    %c0_i32_1 = arith.constant 0 : i32
    return %c0_i32, %c0_i32_0 : i32, i32
  }
  func.func @transform_8(%arg0: i32, %arg1: i32) -> (i32, i32) {
    %c0_i32 = arith.constant 0 : i32
    %c0_i32_0 = arith.constant 0 : i32
    %c0_i32_1 = arith.constant 0 : i32
    return %c0_i32, %c0_i32_0 : i32, i32
  }
  func.func @transform_9(%arg0: i32, %arg1: i32) -> (i32, i32) {
    %c0_i32 = arith.constant 0 : i32
    %c0_i32_0 = arith.constant 0 : i32
    %c0_i32_1 = arith.constant 0 : i32
    return %c0_i32, %c0_i32_0 : i32, i32
  }
  func.func @transform_10(%arg0: i32, %arg1: i32) -> (i32, i32) {
    %c0_i32 = arith.constant 0 : i32
    %c0_i32_0 = arith.constant 0 : i32
    %c0_i32_1 = arith.constant 0 : i32
    return %c0_i32, %c0_i32_0 : i32, i32
  }
  func.func @transform_11(%arg0: i32, %arg1: i32) -> (i32, i32) {
    %c0_i32 = arith.constant 0 : i32
    %c0_i32_0 = arith.constant 0 : i32
    %c0_i32_1 = arith.constant 0 : i32
    return %c0_i32, %c0_i32_0 : i32, i32
  }
  func.func @transform_12(%arg0: i32, %arg1: i32) -> (i32, i32) {
    %c0_i32 = arith.constant 0 : i32
    %c0_i32_0 = arith.constant 0 : i32
    %c0_i32_1 = arith.constant 0 : i32
    return %c0_i32, %c0_i32_0 : i32, i32
  }
  func.func @transform_13(%arg0: i32, %arg1: i32) -> (i32, i32, i32) {
    %c0_i32 = arith.constant 0 : i32
    %c0_i32_0 = arith.constant 0 : i32
    return %arg0, %arg1, %c0_i32 : i32, i32, i32
  }
}

</mosaic_0001>

<llo_original>
// kernel: tpu_custom_call.1
$region0: #{tpu_custom_call.1}
  #allocation0 [shape = 'u32[]', space=smem, size = 0x4, offset = 0x4, fixed_abs, tag = 'smem constant byte address 0x4 - core index']
  #allocation1 [shape = 'u32[144,128]{1,0:T(1,128)}', space=vmem, size = 0x12000, scoped, tag = 'internal scratch']
  #allocation2 [shape = 'bf16[8,160]{1,0:T(8,128)(2,1)}', space=vmem, size = 0x1000, scoped, tag = 'scratch operand']
  #allocation3 [shape = 'f32[8,32]{1,0:T(8,128)}', space=vmem, size = 0x1000, scoped, tag = 'scratch operand']
  #allocation4 [shape = 'f32[1]{0:T(128)S(6)}', space=smem, size = 0x200, scoped, tag = 'scoped memory for tpu_custom_call.1']
  %s0 = inlined_call_operand.vmem [shape: f32[2,8,32], index: 0, kind: input, shape index: {}]
  %s1 = inlined_call_operand.vmem [shape: f32[1,32], index: 1, kind: input, shape index: {}]
  %s2 = inlined_call_operand.vmem [shape: f32[1,32], index: 2, kind: input, shape index: {}]
  %s3 = inlined_call_operand.vmem [shape: bf16[32,160], index: 3, kind: input, shape index: {}]
  %s4 = inlined_call_operand.vmem [shape: f32[1,32], index: 4, kind: input, shape index: {}]
  %s5 = inlined_call_operand.vmem [shape: f32[1,32], index: 5, kind: input, shape index: {}]
  %s6 = inlined_call_operand.<no memory space> [shape: f32[1], index: 6, kind: input, shape index: {}]
  %s7 = inlined_call_operand.vmem [shape: f32[1,32], index: 7, kind: input, shape index: {}]
  %s8 = inlined_call_operand.vmem [shape: f32[1,32], index: 8, kind: input, shape index: {}]
  %s9 = inlined_call_operand.vmem [shape: bf16[32,128], index: 9, kind: input, shape index: {}]
  %s10 = inlined_call_operand.vmem [shape: f32[1,128], index: 10, kind: input, shape index: {}]
  %s11 = inlined_call_operand.vmem [shape: bf16[128,32], index: 11, kind: input, shape index: {}]
  %s12 = inlined_call_operand.vmem [shape: f32[1,32], index: 12, kind: input, shape index: {}]
  %s13 = inlined_call_operand.hbm [shape: f32[2,8,32], index: 13, kind: output, shape index: {}]
  %s14 = sld [smem:[#allocation0]]
  $region89: #{tpu_custom_call.1} parent=0
    _
  %s16 = ssub.s32 1, %s14
  %s17 = scalar_select 0, %s16, %s14
  %18 = sst [smem:[#allocation4]] %s6
  $region1: #{tpu_custom_call.1} parent=0
    #allocation5 [shape = 'u8[8192]{0}', space=vmem, size = 0x2000, scoped, tag = 'output window, operand 0']
    #allocation6 [shape = 's32[2]{0}', space=sflag, size = 0x8, scoped, tag = 'scoped memory for tpu_custom_call.1']
    %19 = vsyncpa [#allocation6], 0
    %s20 = scalar_lea.sflag [#allocation6], 1
    %21 = vsyncpa %s20, 0
    loop: start=0, step=1, limit=4
    $region2: #{tpu_custom_call.1} parent=1 // loop_pre_header
      _
    $region3: #{tpu_custom_call.1} parent=1 // loop_header
      %s23 = sphi 0, %s27
      %p24 = scmp.ge.s32.totalorder %s23, 4
      %s30 = sphi 0, %s42
      %s31 = sphi 0, %s38
      %s32 = sphi 0, %s30
      %s33 = sphi 0, %s31
      %s34 = sphi 0, %s32
      %s35 = sphi 0, %s33
      %s45 = sphi 0, %s47
      %s48 = sphi 0, %s45
      %s49 = sphi 0, %s48
      %s65 = sphi 0, %s49
      %s69 = sphi 0, %s69
      %s71 = sphi 0, %s69
      %s72 = sphi 0, %s71
      %s86 = sphi 0, %s72
      %s90 = sphi 0, %s90
      %s92 = sphi 0, %s90
      %s93 = sphi 0, %s92
      %s107 = sphi 0, %s93
      %s111 = sphi 0, %s111
      %s113 = sphi 0, %s111
      %s114 = sphi 0, %s113
      %s128 = sphi 0, %s114
      %s132 = sphi 0, %s132
      %s134 = sphi 0, %s132
      %s135 = sphi 0, %s134
      %s149 = sphi 0, %s135
      %s153 = sphi 0, %s153
      %s155 = sphi 0, %s153
      %s156 = sphi 0, %s155
      %s170 = sphi 0, %s156
      %s174 = sphi 0, %s174
      %s176 = sphi 0, %s174
      %s177 = sphi 0, %s176
      %s191 = sphi 0, %s177
      %s195 = sphi 0, %s195
      %s197 = sphi 0, %s195
      %s198 = sphi 0, %s197
      %s212 = sphi 0, %s198
      %s216 = sphi 0, %s216
      %s218 = sphi 0, %s216
      %s219 = sphi 0, %s218
      %s233 = sphi 0, %s219
      %s237 = sphi 0, %s237
      %s239 = sphi 0, %s237
      %s240 = sphi 0, %s239
      %s254 = sphi 0, %s240
      %s258 = sphi 0, %s258
      %s260 = sphi 0, %s258
      %s261 = sphi 0, %s260
      %s275 = sphi 0, %s261
      %s279 = sphi 0, %s279
      %s281 = sphi 0, %s279
      %s282 = sphi 0, %s281
      %s296 = sphi 0, %s282
      %s300 = sphi 0, %s300
      %s302 = sphi 0, %s300
      %s303 = sphi 0, %s302
      %s317 = sphi 0, %s303
      %s325 = sphi 0, %s327
      %s328 = sphi 0, %s325
      %s329 = sphi 0, %s328
      %s345 = sphi 0, %s329
    $region4: #{tpu_custom_call.1} parent=1 // loop_header_branch
      %26 = sbr.rel (%p24) target = $region8
    $region5: #{tpu_custom_call.1} parent=1 // loop_body
      %s28 = ssub.s32 %s23, 1
      %s29 = ssub.s32 %s23, 2
      %s36 = sadd.s32 1, %s31
      %p37 = scmp.ge.s32.totalorder %s36, 1
      %s38 = scalar_select %p37, 0, %s36
      %s39 = sadd.s32 1, %s30
      %s40 = scalar_select %p37, %s39, %s30
      %p41 = scmp.ge.s32.totalorder %s40, 2
      %s42 = scalar_select %p41, 0, %s40
      %s43 = ssub.s32 %s30, %s42
      %p44 = scmp.eq.s32.totalorder %s43, 0
      %s46 = sadd.s32 %s45, 1
      %s47 = scalar_select %p44, %s45, %s46
      %p50 = pneg %p44
      %p51 = scmp.eq.s32.totalorder %s23, 1
      %p52 = por %p50, %p51
      %p53 = scmp.ne.s32.totalorder %s45, %s48
      %p54 = scmp.eq.s32.totalorder %s23, 0
      %p55 = por %p53, %p54
      %p56 = scmp.ne.s32.totalorder %s45, %s48
      %p57 = scmp.eq.s32.totalorder %s28, 1
      %p58 = por %p56, %p57
      %p59 = scmp.ne.s32.totalorder %s48, %s49
      %p60 = scmp.eq.s32.totalorder %s28, 0
      %p61 = por %p59, %p60
      %p62 = scmp.ne.s32.totalorder %s48, %s49
      %p63 = scmp.eq.s32.totalorder %s29, 1
      %p64 = por %p62, %p63
      %p66 = scmp.ne.s32.totalorder %s49, %s65
      %p67 = scmp.eq.s32.totalorder %s29, 0
      %p68 = por %p66, %p67
      %s70 = sadd.s32 %s69, 1
      %p73 = scmp.eq.s32.totalorder %s23, 1
      %p74 = scmp.ne.s32.totalorder %s69, %s71
      %p75 = scmp.eq.s32.totalorder %s23, 0
      %p76 = por %p74, %p75
      %p77 = scmp.ne.s32.totalorder %s69, %s71
      %p78 = scmp.eq.s32.totalorder %s28, 1
      %p79 = por %p77, %p78
      %p80 = scmp.ne.s32.totalorder %s71, %s72
      %p81 = scmp.eq.s32.totalorder %s28, 0
      %p82 = por %p80, %p81
      %p83 = scmp.ne.s32.totalorder %s71, %s72
      %p84 = scmp.eq.s32.totalorder %s29, 1
      %p85 = por %p83, %p84
      %p87 = scmp.ne.s32.totalorder %s72, %s86
      %p88 = scmp.eq.s32.totalorder %s29, 0
      %p89 = por %p87, %p88
      %s91 = sadd.s32 %s90, 1
      %p94 = scmp.eq.s32.totalorder %s23, 1
      %p95 = scmp.ne.s32.totalorder %s90, %s92
      %p96 = scmp.eq.s32.totalorder %s23, 0
      %p97 = por %p95, %p96
      %p98 = scmp.ne.s32.totalorder %s90, %s92
      %p99 = scmp.eq.s32.totalorder %s28, 1
      %p100 = por %p98, %p99
      %p101 = scmp.ne.s32.totalorder %s92, %s93
      %p102 = scmp.eq.s32.totalorder %s28, 0
      %p103 = por %p101, %p102
      %p104 = scmp.ne.s32.totalorder %s92, %s93
      %p105 = scmp.eq.s32.totalorder %s29, 1
      %p106 = por %p104, %p105
      %p108 = scmp.ne.s32.totalorder %s93, %s107
      %p109 = scmp.eq.s32.totalorder %s29, 0
      %p110 = por %p108, %p109
      %s112 = sadd.s32 %s111, 1
      %p115 = scmp.eq.s32.totalorder %s23, 1
      %p116 = scmp.ne.s32.totalorder %s111, %s113
      %p117 = scmp.eq.s32.totalorder %s23, 0
      %p118 = por %p116, %p117
      %p119 = scmp.ne.s32.totalorder %s111, %s113
      %p120 = scmp.eq.s32.totalorder %s28, 1
      %p121 = por %p119, %p120
      %p122 = scmp.ne.s32.totalorder %s113, %s114
      %p123 = scmp.eq.s32.totalorder %s28, 0
      %p124 = por %p122, %p123
      %p125 = scmp.ne.s32.totalorder %s113, %s114
      %p126 = scmp.eq.s32.totalorder %s29, 1
      %p127 = por %p125, %p126
      %p129 = scmp.ne.s32.totalorder %s114, %s128
      %p130 = scmp.eq.s32.totalorder %s29, 0
      %p131 = por %p129, %p130
      %s133 = sadd.s32 %s132, 1
      %p136 = scmp.eq.s32.totalorder %s23, 1
      %p137 = scmp.ne.s32.totalorder %s132, %s134
      %p138 = scmp.eq.s32.totalorder %s23, 0
      %p139 = por %p137, %p138
      %p140 = scmp.ne.s32.totalorder %s132, %s134
      %p141 = scmp.eq.s32.totalorder %s28, 1
      %p142 = por %p140, %p141
      %p143 = scmp.ne.s32.totalorder %s134, %s135
      %p144 = scmp.eq.s32.totalorder %s28, 0
      %p145 = por %p143, %p144
      %p146 = scmp.ne.s32.totalorder %s134, %s135
      %p147 = scmp.eq.s32.totalorder %s29, 1
      %p148 = por %p146, %p147
      %p150 = scmp.ne.s32.totalorder %s135, %s149
      %p151 = scmp.eq.s32.totalorder %s29, 0
      %p152 = por %p150, %p151
      %s154 = sadd.s32 %s153, 1
      %p157 = scmp.eq.s32.totalorder %s23, 1
      %p158 = scmp.ne.s32.totalorder %s153, %s155
      %p159 = scmp.eq.s32.totalorder %s23, 0
      %p160 = por %p158, %p159
      %p161 = scmp.ne.s32.totalorder %s153, %s155
      %p162 = scmp.eq.s32.totalorder %s28, 1
      %p163 = por %p161, %p162
      %p164 = scmp.ne.s32.totalorder %s155, %s156
      %p165 = scmp.eq.s32.totalorder %s28, 0
      %p166 = por %p164, %p165
      %p167 = scmp.ne.s32.totalorder %s155, %s156
      %p168 = scmp.eq.s32.totalorder %s29, 1
      %p169 = por %p167, %p168
      %p171 = scmp.ne.s32.totalorder %s156, %s170
      %p172 = scmp.eq.s32.totalorder %s29, 0
      %p173 = por %p171, %p172
      %s175 = sadd.s32 %s174, 1
      %p178 = scmp.eq.s32.totalorder %s23, 1
      %p179 = scmp.ne.s32.totalorder %s174, %s176
      %p180 = scmp.eq.s32.totalorder %s23, 0
      %p181 = por %p179, %p180
      %p182 = scmp.ne.s32.totalorder %s174, %s176
      %p183 = scmp.eq.s32.totalorder %s28, 1
      %p184 = por %p182, %p183
      %p185 = scmp.ne.s32.totalorder %s176, %s177
      %p186 = scmp.eq.s32.totalorder %s28, 0
      %p187 = por %p185, %p186
      %p188 = scmp.ne.s32.totalorder %s176, %s177
      %p189 = scmp.eq.s32.totalorder %s29, 1
      %p190 = por %p188, %p189
      %p192 = scmp.ne.s32.totalorder %s177, %s191
      %p193 = scmp.eq.s32.totalorder %s29, 0
      %p194 = por %p192, %p193
      %s196 = sadd.s32 %s195, 1
      %p199 = scmp.eq.s32.totalorder %s23, 1
      %p200 = scmp.ne.s32.totalorder %s195, %s197
      %p201 = scmp.eq.s32.totalorder %s23, 0
      %p202 = por %p200, %p201
      %p203 = scmp.ne.s32.totalorder %s195, %s197
      %p204 = scmp.eq.s32.totalorder %s28, 1
      %p205 = por %p203, %p204
      %p206 = scmp.ne.s32.totalorder %s197, %s198
      %p207 = scmp.eq.s32.totalorder %s28, 0
      %p208 = por %p206, %p207
      %p209 = scmp.ne.s32.totalorder %s197, %s198
      %p210 = scmp.eq.s32.totalorder %s29, 1
      %p211 = por %p209, %p210
      %p213 = scmp.ne.s32.totalorder %s198, %s212
      %p214 = scmp.eq.s32.totalorder %s29, 0
      %p215 = por %p213, %p214
      %s217 = sadd.s32 %s216, 1
      %p220 = scmp.eq.s32.totalorder %s23, 1
      %p221 = scmp.ne.s32.totalorder %s216, %s218
      %p222 = scmp.eq.s32.totalorder %s23, 0
      %p223 = por %p221, %p222
      %p224 = scmp.ne.s32.totalorder %s216, %s218
      %p225 = scmp.eq.s32.totalorder %s28, 1
      %p226 = por %p224, %p225
      %p227 = scmp.ne.s32.totalorder %s218, %s219
      %p228 = scmp.eq.s32.totalorder %s28, 0
      %p229 = por %p227, %p228
      %p230 = scmp.ne.s32.totalorder %s218, %s219
      %p231 = scmp.eq.s32.totalorder %s29, 1
      %p232 = por %p230, %p231
      %p234 = scmp.ne.s32.totalorder %s219, %s233
      %p235 = scmp.eq.s32.totalorder %s29, 0
      %p236 = por %p234, %p235
      %s238 = sadd.s32 %s237, 1
      %p241 = scmp.eq.s32.totalorder %s23, 1
      %p242 = scmp.ne.s32.totalorder %s237, %s239
      %p243 = scmp.eq.s32.totalorder %s23, 0
      %p244 = por %p242, %p243
      %p245 = scmp.ne.s32.totalorder %s237, %s239
      %p246 = scmp.eq.s32.totalorder %s28, 1
      %p247 = por %p245, %p246
      %p248 = scmp.ne.s32.totalorder %s239, %s240
      %p249 = scmp.eq.s32.totalorder %s28, 0
      %p250 = por %p248, %p249
      %p251 = scmp.ne.s32.totalorder %s239, %s240
      %p252 = scmp.eq.s32.totalorder %s29, 1
      %p253 = por %p251, %p252
      %p255 = scmp.ne.s32.totalorder %s240, %s254
      %p256 = scmp.eq.s32.totalorder %s29, 0
      %p257 = por %p255, %p256
      %s259 = sadd.s32 %s258, 1
      %p262 = scmp.eq.s32.totalorder %s23, 1
      %p263 = scmp.ne.s32.totalorder %s258, %s260
      %p264 = scmp.eq.s32.totalorder %s23, 0
      %p265 = por %p263, %p264
      %p266 = scmp.ne.s32.totalorder %s258, %s260
      %p267 = scmp.eq.s32.totalorder %s28, 1
      %p268 = por %p266, %p267
      %p269 = scmp.ne.s32.totalorder %s260, %s261
      %p270 = scmp.eq.s32.totalorder %s28, 0
      %p271 = por %p269, %p270
      %p272 = scmp.ne.s32.totalorder %s260, %s261
      %p273 = scmp.eq.s32.totalorder %s29, 1
      %p274 = por %p272, %p273
      %p276 = scmp.ne.s32.totalorder %s261, %s275
      %p277 = scmp.eq.s32.totalorder %s29, 0
      %p278 = por %p276, %p277
      %s280 = sadd.s32 %s279, 1
      %p283 = scmp.eq.s32.totalorder %s23, 1
      %p284 = scmp.ne.s32.totalorder %s279, %s281
      %p285 = scmp.eq.s32.totalorder %s23, 0
      %p286 = por %p284, %p285
      %p287 = scmp.ne.s32.totalorder %s279, %s281
      %p288 = scmp.eq.s32.totalorder %s28, 1
      %p289 = por %p287, %p288
      %p290 = scmp.ne.s32.totalorder %s281, %s282
      %p291 = scmp.eq.s32.totalorder %s28, 0
      %p292 = por %p290, %p291
      %p293 = scmp.ne.s32.totalorder %s281, %s282
      %p294 = scmp.eq.s32.totalorder %s29, 1
      %p295 = por %p293, %p294
      %p297 = scmp.ne.s32.totalorder %s282, %s296
      %p298 = scmp.eq.s32.totalorder %s29, 0
      %p299 = por %p297, %p298
      %s301 = sadd.s32 %s300, 1
      %p304 = scmp.eq.s32.totalorder %s23, 1
      %p305 = scmp.ne.s32.totalorder %s300, %s302
      %p306 = scmp.eq.s32.totalorder %s23, 0
      %p307 = por %p305, %p306
      %p308 = scmp.ne.s32.totalorder %s300, %s302
      %p309 = scmp.eq.s32.totalorder %s28, 1
      %p310 = por %p308, %p309
      %p311 = scmp.ne.s32.totalorder %s302, %s303
      %p312 = scmp.eq.s32.totalorder %s28, 0
      %p313 = por %p311, %p312
      %p314 = scmp.ne.s32.totalorder %s302, %s303
      %p315 = scmp.eq.s32.totalorder %s29, 1
      %p316 = por %p314, %p315
      %p318 = scmp.ne.s32.totalorder %s303, %s317
      %p319 = scmp.eq.s32.totalorder %s29, 0
      %p320 = por %p318, %p319
      %s321 = ssub.s32 %s30, %s42
      %s322 = ssub.s32 %s31, %s38
      %s323 = sor.u32 %s321, %s322
      %p324 = scmp.eq.s32.totalorder %s323, 0
      %s326 = sadd.s32 %s325, 1
      %s327 = scalar_select %p324, %s325, %s326
      %p330 = pneg %p324
      %p331 = scmp.eq.s32.totalorder %s23, 1
      %p332 = por %p330, %p331
      %p333 = scmp.ne.s32.totalorder %s325, %s328
      %p334 = scmp.eq.s32.totalorder %s23, 0
      %p335 = por %p333, %p334
      %p336 = scmp.ne.s32.totalorder %s325, %s328
      %p337 = scmp.eq.s32.totalorder %s28, 1
      %p338 = por %p336, %p337
      %p339 = scmp.ne.s32.totalorder %s328, %s329
      %p340 = scmp.eq.s32.totalorder %s28, 0
      %p341 = por %p339, %p340
      %p342 = scmp.ne.s32.totalorder %s328, %s329
      %p343 = scmp.eq.s32.totalorder %s29, 1
      %p344 = por %p342, %p343
      %p346 = scmp.ne.s32.totalorder %s329, %s345
      %p347 = scmp.eq.s32.totalorder %s29, 0
      %p348 = por %p346, %p347
      %p349 = scmp.le.s32.totalorder 1, %s23
      %p350 = scmp.lt.s32.totalorder %s23, 3
      %p351 = pnand %p349, %p350
      %p352 = pneg %p351
      // Predicated region
      $region9: #{tpu_custom_call.1} parent=5 // pred_check
        _
      $region10: #{tpu_custom_call.1} parent=5 // pred_check_branch
        %354 = sbr.rel (%p351) target = $region12
      $region11: #{tpu_custom_call.1} parent=5 // pred_region
        %s355 = ssub.s32 %s23, 1
        // Predicated region
        $region13: #{tpu_custom_call.1} parent=11 // pred_check
          %p356 = pneg %p82
        $region14: #{tpu_custom_call.1} parent=11 // pred_check_branch
          %358 = sbr.rel (%p356) target = $region16
        $region15: #{tpu_custom_call.1} parent=11 // pred_region
          _
        $region16: #{tpu_custom_call.1} parent=11 // pred_fallthru
          _
        // Predicated region
        $region17: #{tpu_custom_call.1} parent=11 // pred_check
          %p359 = pneg %p103
        $region18: #{tpu_custom_call.1} parent=11 // pred_check_branch
          %361 = sbr.rel (%p359) target = $region20
        $region19: #{tpu_custom_call.1} parent=11 // pred_region
          _
        $region20: #{tpu_custom_call.1} parent=11 // pred_fallthru
          _
        // Predicated region
        $region21: #{tpu_custom_call.1} parent=11 // pred_check
          %p362 = pneg %p124
        $region22: #{tpu_custom_call.1} parent=11 // pred_check_branch
          %364 = sbr.rel (%p362) target = $region24
        $region23: #{tpu_custom_call.1} parent=11 // pred_region
          _
        $region24: #{tpu_custom_call.1} parent=11 // pred_fallthru
          _
        // Predicated region
        $region25: #{tpu_custom_call.1} parent=11 // pred_check
          %p365 = pneg %p145
        $region26: #{tpu_custom_call.1} parent=11 // pred_check_branch
          %367 = sbr.rel (%p365) target = $region28
        $region27: #{tpu_custom_call.1} parent=11 // pred_region
          _
        $region28: #{tpu_custom_call.1} parent=11 // pred_fallthru
          _
        // Predicated region
        $region29: #{tpu_custom_call.1} parent=11 // pred_check
          %p368 = pneg %p166
        $region30: #{tpu_custom_call.1} parent=11 // pred_check_branch
          %370 = sbr.rel (%p368) target = $region32
        $region31: #{tpu_custom_call.1} parent=11 // pred_region
          _
        $region32: #{tpu_custom_call.1} parent=11 // pred_fallthru
          _
        // Predicated region
        $region33: #{tpu_custom_call.1} parent=11 // pred_check
          %p371 = pneg %p187
        $region34: #{tpu_custom_call.1} parent=11 // pred_check_branch
          %373 = sbr.rel (%p371) target = $region36
        $region35: #{tpu_custom_call.1} parent=11 // pred_region
          _
        $region36: #{tpu_custom_call.1} parent=11 // pred_fallthru
          _
        // Predicated region
        $region37: #{tpu_custom_call.1} parent=11 // pred_check
          %p374 = pneg %p208
        $region38: #{tpu_custom_call.1} parent=11 // pred_check_branch
          %376 = sbr.rel (%p374) target = $region40
        $region39: #{tpu_custom_call.1} parent=11 // pred_region
          _
        $region40: #{tpu_custom_call.1} parent=11 // pred_fallthru
          _
        // Predicated region
        $region41: #{tpu_custom_call.1} parent=11 // pred_check
          %p377 = pneg %p229
        $region42: #{tpu_custom_call.1} parent=11 // pred_check_branch
          %379 = sbr.rel (%p377) target = $region44
        $region43: #{tpu_custom_call.1} parent=11 // pred_region
          _
        $region44: #{tpu_custom_call.1} parent=11 // pred_fallthru
          _
        // Predicated region
        $region45: #{tpu_custom_call.1} parent=11 // pred_check
          %p380 = pneg %p250
        $region46: #{tpu_custom_call.1} parent=11 // pred_check_branch
          %382 = sbr.rel (%p380) target = $region48
        $region47: #{tpu_custom_call.1} parent=11 // pred_region
          _
        $region48: #{tpu_custom_call.1} parent=11 // pred_fallthru
          _
        // Predicated region
        $region49: #{tpu_custom_call.1} parent=11 // pred_check
          %p383 = pneg %p271
        $region50: #{tpu_custom_call.1} parent=11 // pred_check_branch
          %385 = sbr.rel (%p383) target = $region52
        $region51: #{tpu_custom_call.1} parent=11 // pred_region
          _
        $region52: #{tpu_custom_call.1} parent=11 // pred_fallthru
          _
        // Predicated region
        $region53: #{tpu_custom_call.1} parent=11 // pred_check
          %p386 = pneg %p292
        $region54: #{tpu_custom_call.1} parent=11 // pred_check_branch
          %388 = sbr.rel (%p386) target = $region56
        $region55: #{tpu_custom_call.1} parent=11 // pred_region
          _
        $region56: #{tpu_custom_call.1} parent=11 // pred_fallthru
          _
        // Predicated region
        $region57: #{tpu_custom_call.1} parent=11 // pred_check
          %p389 = pneg %p313
        $region58: #{tpu_custom_call.1} parent=11 // pred_check_branch
          %391 = sbr.rel (%p389) target = $region60
        $region59: #{tpu_custom_call.1} parent=11 // pred_region
          _
        $region60: #{tpu_custom_call.1} parent=11 // pred_fallthru
          _
      $region12: #{tpu_custom_call.1} parent=5 // pred_fallthru
        _
      %p392 = scmp.lt.s32.totalorder %s23, 2
      // Predicated region
      $region61: #{tpu_custom_call.1} parent=5 // pred_check
        %p393 = pneg %p392
      $region62: #{tpu_custom_call.1} parent=5 // pred_check_branch
        %395 = sbr.rel (%p393) target = $region64
      $region63: #{tpu_custom_call.1} parent=5 // pred_region
        // Predicated region
        $region65: #{tpu_custom_call.1} parent=63 // pred_check
          %p396 = pneg %p55
        $region66: #{tpu_custom_call.1} parent=63 // pred_check_branch
          %398 = sbr.rel (%p396) target = $region68
        $region67: #{tpu_custom_call.1} parent=63 // pred_region
          %p399 = scmp.lt.s32.totalorder %s30, 1
          %s400 = scalar_select %p399, %s30, 1
          %s401 = smul.addr %s400, 8
          %s402 = scalar_lea.vmem %s0, %s401
        $region68: #{tpu_custom_call.1} parent=63 // pred_fallthru
          _
      $region64: #{tpu_custom_call.1} parent=5 // pred_fallthru
        _
      %p403 = scmp.le.s32.totalorder 1, %s23
      %p404 = scmp.lt.s32.totalorder %s23, 3
      %p405 = pnand %p403, %p404
      %p406 = pneg %p405
      // Predicated region
      $region69: #{tpu_custom_call.1} parent=5 // pred_check
        _
      $region70: #{tpu_custom_call.1} parent=5 // pred_check_branch
        %408 = sbr.rel (%p405) target = $region72
      $region71: #{tpu_custom_call.1} parent=5 // pred_region
        %s409 = ssub.s32 %s23, 1
        %p410 = scmp.lt.s32.totalorder %s32, 1
        %s411 = scalar_select %p410, %s32, 1
        %s412 = smul.addr %s411, 8
        %s413 = scalar_lea.vmem %s0, %s412
        %p414 = pneg %p61
        %p415 = pneg %p58
        %p416 = pneg %p82
        %p417 = pneg %p79
        %p418 = pneg %p103
        %p419 = pneg %p100
        %p420 = pneg %p124
        %p421 = pneg %p121
        %p422 = pneg %p145
        %p423 = pneg %p142
        %p424 = pneg %p166
        %p425 = pneg %p163
        %p426 = pneg %p187
        %p427 = pneg %p184
        %p428 = pneg %p208
        %p429 = pneg %p205
        %p430 = pneg %p229
        %p431 = pneg %p226
        %p432 = pneg %p250
        %p433 = pneg %p247
        %p434 = pneg %p271
        %p435 = pneg %p268
        %p436 = pneg %p292
        %p437 = pneg %p289
        %p438 = pneg %p313
        %p439 = pneg %p310
        %p440 = pneg %p341
        %p441 = pneg %p338
        %s442 = sand.u32 %s328, 1
        %s443 = scalar_lea.sflag [#allocation6], %s442
        %s444 = sand.u32 %s328, 1
        %s445 = smul.addr %s444, 8
        %s446 = scalar_lea.vmem [#allocation5], %s445
        %p447 = scmp.lt.s32.totalorder %s32, 1
        %s448 = scalar_select %p447, %s32, 1
        %s449 = smul.addr %s448, 8
        %s450 = scalar_lea.vmem %s0, %s449
        %s452 = sld [smem:[#allocation4]]
        %p453 = scmp.eq.s32.totalorder %s33, 0
        // Predicated region
        $region73: #{tpu_custom_call.1} parent=71 // pred_check
          %p454 = pneg %p453
        $region74: #{tpu_custom_call.1} parent=71 // pred_check_branch
          %456 = sbr.rel (%p454) target = $region76
        $region75: #{tpu_custom_call.1} parent=71 // pred_region
          %v457 = vld [vmem:[%s450] sm:$0xff]
          %v458 = vld [vmem:[%s1] sm:$0x1]
          %v459 = vld [vmem:[%s2] sm:$0x1]
          %vm460 = vcmask 261120
          %v461 = vsel %vm460, %v457, 0.0
          %462 = vadd.xlane.f32.xlu0 %v461
          %v463 = vpop.xlane.xlu0 %462
          %v464 = vrcp.pop 32.0
          %v465 = vmul.f32 %v463, %v464
          %v466 = vsub.f32 %v457, %v465
          %v467 = vmul.f32 %v466, %v466
          %v468 = vsel %vm460, %v467, 0.0
          %469 = vadd.xlane.f32.xlu0 %v468
          %v470 = vpop.xlane.xlu0 %469
          %v471 = vmul.f32 %v470, %v464
          %v472 = vadd.f32 %v471, 1e-05
          %v473 = vrsqrt.pop %v472
          %v474 = vmul.f32 %v466, %v473
          %v476 = vlaneseq
          %v477 = vshrl.u32 %v476, 7
          %v478 = vsub.s32 0, %v477
          %v479 = vrot.slane %v458, %v478
          %v481 = vmul.f32 %v474, %v479
          %v483 = vlaneseq
          %v484 = vshrl.u32 %v483, 7
          %v485 = vsub.s32 0, %v484
          %v486 = vrot.slane %v459, %v485
          %v488 = vadd.f32 %v481, %v486
          %v489 = vpack.c.bf16 %v488, %v488
          %v490 = vld [vmem:[%s3] sm:$0xff]
          %v491 = vld [vmem:[%s3 + $0x8] sm:$0xff]
          %v492 = vld [vmem:[%s3 + $0x10] sm:$0xff]
          %v493 = vld [vmem:[%s3 + $0x18] sm:$0xff]
          %v498 = vunpack.c.l.b16 %v490
          %v499 = vunpack.c.h.b16 %v490
          %v500 = vunpack.c.l.b16 %v491
          %v501 = vunpack.c.h.b16 %v491
          %v502 = vunpack.c.l.b16 %v492
          %v503 = vunpack.c.h.b16 %v492
          %v504 = vunpack.c.l.b16 %v493
          %v505 = vunpack.c.h.b16 %v493
          %v506 = vpack.c.b16 %v500, %v498
          %v507 = vpack.c.b16 %v501, %v499
          %v508 = vpack.c.b16 %v504, %v502
          %v509 = vpack.c.b16 %v505, %v503
          %v515 = vsel %vm460, %v489, 0
          %517 = vmatprep.subr.bf16.mxu0 %v507
          %518 = vmatpush1.bf16.msra.mxu0 %v506
          %519 = vmatprep.subr.bf16.mxu0 %v509
          %520 = vmatpush1.bf16.msra.mxu0 %v508
          %521 = vmatprep.subr.bf16.mxu0 0
          %522 = vmatpush1.bf16.msra.mxu0 0
          %523 = vmatprep.subr.bf16.mxu0 0
          %524 = vmatpush1.bf16.msra.mxu0 0
          %525 = vmatprep.subr.bf16.mxu0 0
          %526 = vmatpush1.bf16.msra.mxu0 0
          %527 = vmatprep.subr.bf16.mxu0 0
          %528 = vmatpush1.bf16.msra.mxu0 0
          %529 = vmatprep.subr.bf16.mxu0 0
          %530 = vmatpush1.bf16.msra.mxu0 0
          %531 = vmatprep.subr.bf16.mxu0 0
          %532 = vmatpush1.bf16.msra.mxu0 0
          %533 = vmatprep.subr.bf16.mxu0 0
          %534 = vmatpush1.bf16.msra.mxu0 0
          %535 = vmatprep.subr.bf16.mxu0 0
          %536 = vmatpush1.bf16.msra.mxu0 0
          %537 = vmatprep.subr.bf16.mxu0 0
          %538 = vmatpush1.bf16.msra.mxu0 0
          %539 = vmatprep.subr.bf16.mxu0 0
          %540 = vmatpush1.bf16.msra.mxu0 0
          %541 = vmatprep.subr.bf16.mxu0 0
          %542 = vmatpush1.bf16.msra.mxu0 0
          %543 = vmatprep.subr.bf16.mxu0 0
          %544 = vmatpush1.bf16.msra.mxu0 0
          %545 = vmatprep.subr.bf16.mxu0 0
          %546 = vmatpush1.bf16.msra.mxu0 0
          %547 = vmatprep.subr.bf16.mxu0 0
          %548 = vmatpush1.bf16.msra.mxu0 0
          %549 = vmatprep.mubr.bf16.mxu0 0
          %550 = vmatmul.mubr.bf16.gmra.mrb[0].mxu0 %v515
          %v551 = vpop.f32.mrb[0].mxu0
          %v552 = vadd.f32 0.0, %v551
          %v553 = vpop.f32.mrb[0].mxu0
          %v554 = vadd.f32 0.0, %v553
          %v555 = vpop.f32.mrb[0].mxu0
          %v556 = vpop.f32.mrb[0].mxu0
          %557 = vdwg.mxu0
          %v558 = vpack.c.bf16 %v552, %v552
          %v559 = vpack.c.bf16 %v554, %v554
          %v562 = vunpack.c.l.b16 %v558
          %v563 = vunpack.c.l.b16 %v559
          %v564 = vpack.c.b16 %v563, %v562
          %vm566 = vcmask 1043456
          %vm567 = vcmask 261124
          %vm568 = vmor %vm567, %vm566
          %569 = vst.msk [vmem:[#allocation2] sm:$0xff] %vm568, %v564
        $region76: #{tpu_custom_call.1} parent=71 // pred_fallthru
          _
        %s570 = smul.u32 %s33, 8
        %s571 = scalar_lea.vmem %s450, %s570
        %v572 = vld [vmem:[%s571] sm:$0xff]
        %s573 = sshra.s32 %s570, 3
        %s574 = sand.u32 %s570, 7
        %s575 = smul.u32 %s573, 2
        %s576 = smul.addr %s575, 4
        %s577 = scalar_lea.vmem [#allocation2], %s576
        %v578 = vld [vmem:[%s577] sm:$0xf]
        %v579 = vld [vmem:[#allocation2] sm:$0xf]
        %v580 = vld [vmem:[#allocation2 + $0x4] sm:$0xf]
        %v582 = vunpack.c.l.b16 %v579
        %v583 = vpack.c.b16 %v582, %v582
        %584 = vrot.lane.b32.xlu0 %v583, 96
        %v585 = vpop.permute.xlu0 %584
        %vm586 = vcmask 64512
        %v588 = vsel %vm586, %v578, 0
        %v591 = vsel %vm586, %v585, 0
        %593 = vmatprep.subr.bf16.mxu0 0
        %594 = vmatpush1.bf16.xpose.msra.mxu0 %v591
        %595 = vmatprep.subr.bf16.mxu0 0
        %596 = vmatpush1.bf16.xpose.msra.mxu0 0
        %597 = vmatprep.subr.bf16.mxu0 0
        %598 = vmatpush1.bf16.xpose.msra.mxu0 0
        %599 = vmatprep.subr.bf16.mxu0 0
        %600 = vmatpush1.bf16.xpose.msra.mxu0 0
        %601 = vmatprep.subr.bf16.mxu0 0
        %602 = vmatpush1.bf16.xpose.msra.mxu0 0
        %603 = vmatprep.subr.bf16.mxu0 0
        %604 = vmatpush1.bf16.xpose.msra.mxu0 0
        %605 = vmatprep.subr.bf16.mxu0 0
        %606 = vmatpush1.bf16.xpose.msra.mxu0 0
        %607 = vmatprep.subr.bf16.mxu0 0
        %608 = vmatpush1.bf16.xpose.msra.mxu0 0
        %609 = vmatprep.subr.bf16.mxu0 0
        %610 = vmatpush1.bf16.xpose.msra.mxu0 0
        %611 = vmatprep.subr.bf16.mxu0 0
        %612 = vmatpush1.bf16.xpose.msra.mxu0 0
        %613 = vmatprep.subr.bf16.mxu0 0
        %614 = vmatpush1.bf16.xpose.msra.mxu0 0
        %615 = vmatprep.subr.bf16.mxu0 0
        %616 = vmatpush1.bf16.xpose.msra.mxu0 0
        %617 = vmatprep.subr.bf16.mxu0 0
        %618 = vmatpush1.bf16.xpose.msra.mxu0 0
        %619 = vmatprep.subr.bf16.mxu0 0
        %620 = vmatpush1.bf16.xpose.msra.mxu0 0
        %621 = vmatprep.subr.bf16.mxu0 0
        %622 = vmatpush1.bf16.xpose.msra.mxu0 0
        %623 = vmatprep.subr.bf16.mxu0 0
        %624 = vmatpush1.bf16.xpose.msra.mxu0 0
        %625 = vmatprep.mubr.bf16.mxu0 0
        %626 = vmatmul.mubr.bf16.gmra.mrb[0].mxu0 %v588
        %v627 = vpop.f32.mrb[0].mxu0
        %v628 = vadd.f32 0.0, %v627
        %v629 = vpop.f32.mrb[0].mxu0
        %v630 = vpop.f32.mrb[0].mxu0
        %v631 = vpop.f32.mrb[0].mxu0
        %632 = vdwg.mxu0
        %v634 = vunpack.c.l.b16 %v578
        %v635 = vpack.c.b16 %v634, %v634
        %636 = vrot.lane.b32.xlu0 %v635, 64
        %v637 = vpop.permute.xlu0 %636
        %638 = vrot.lane.b32.xlu0 %v583, 32
        %v639 = vpop.permute.xlu0 %638
        %v641 = vsel %vm586, %v637, 0
        %v644 = vsel %vm586, %v639, 0
        %646 = vmatprep.subr.bf16.mxu0 0
        %647 = vmatpush1.bf16.xpose.msra.mxu0 %v644
        %648 = vmatprep.subr.bf16.mxu0 0
        %649 = vmatpush1.bf16.xpose.msra.mxu0 0
        %650 = vmatprep.subr.bf16.mxu0 0
        %651 = vmatpush1.bf16.xpose.msra.mxu0 0
        %652 = vmatprep.subr.bf16.mxu0 0
        %653 = vmatpush1.bf16.xpose.msra.mxu0 0
        %654 = vmatprep.subr.bf16.mxu0 0
        %655 = vmatpush1.bf16.xpose.msra.mxu0 0
        %656 = vmatprep.subr.bf16.mxu0 0
        %657 = vmatpush1.bf16.xpose.msra.mxu0 0
        %658 = vmatprep.subr.bf16.mxu0 0
        %659 = vmatpush1.bf16.xpose.msra.mxu0 0
        %660 = vmatprep.subr.bf16.mxu0 0
        %661 = vmatpush1.bf16.xpose.msra.mxu0 0
        %662 = vmatprep.subr.bf16.mxu0 0
        %663 = vmatpush1.bf16.xpose.msra.mxu0 0
        %664 = vmatprep.subr.bf16.mxu0 0
        %665 = vmatpush1.bf16.xpose.msra.mxu0 0
        %666 = vmatprep.subr.bf16.mxu0 0
        %667 = vmatpush1.bf16.xpose.msra.mxu0 0
        %668 = vmatprep.subr.bf16.mxu0 0
        %669 = vmatpush1.bf16.xpose.msra.mxu0 0
        %670 = vmatprep.subr.bf16.mxu0 0
        %671 = vmatpush1.bf16.xpose.msra.mxu0 0
        %672 = vmatprep.subr.bf16.mxu0 0
        %673 = vmatpush1.bf16.xpose.msra.mxu0 0
        %674 = vmatprep.subr.bf16.mxu0 0
        %675 = vmatpush1.bf16.xpose.msra.mxu0 0
        %676 = vmatprep.subr.bf16.mxu0 0
        %677 = vmatpush1.bf16.xpose.msra.mxu0 0
        %678 = vmatprep.mubr.bf16.mxu0 0
        %679 = vmatmul.mubr.bf16.gmra.mrb[0].mxu0 %v641
        %v680 = vpop.f32.mrb[0].mxu0
        %v681 = vadd.f32 0.0, %v680
        %v682 = vpop.f32.mrb[0].mxu0
        %v683 = vpop.f32.mrb[0].mxu0
        %v684 = vpop.f32.mrb[0].mxu0
        %685 = vdwg.mxu0
        %v686 = vsel %vm586, %v628, -inf
        %687 = vmax.xlane.f32.xlu0 %v686
        %v688 = vpop.xlane.xlu0 %687
        %v689 = vsub.f32 %v628, %v688
        %v690 = vmul.f32 %v689, 1.442695
        %v691 = vpow.pop %v690
        %v692 = vsel %vm586, %v691, 0.0
        %693 = vadd.xlane.f32.xlu0 %v692
        %v694 = vpop.xlane.xlu0 %693
        %v695 = vrcp.pop %v694
        %v696 = vmul.f32 %v691, %v695
        %v697 = vsel %vm586, %v681, -inf
        %698 = vmax.xlane.f32.xlu0 %v697
        %v699 = vpop.xlane.xlu0 %698
        %v700 = vsub.f32 %v681, %v699
        %v701 = vmul.f32 %v700, 1.442695
        %v702 = vpow.pop %v701
        %v703 = vsel %vm586, %v702, 0.0
        %704 = vadd.xlane.f32.xlu0 %v703
        %v705 = vpop.xlane.xlu0 %704
        %v706 = vrcp.pop %v705
        %v707 = vmul.f32 %v702, %v706
        %v708 = vstv %s452
        %v709 = vmul.f32 %v708, %v707
        %v710 = vsub.f32 %v696, %v709
        %v711 = vpack.c.bf16 %v710, %v710
        %v713 = vsel %vm586, %v711, 0
        %vm715 = vcmask 1043456
        %v717 = vsel %vm715, %v580, 0
        %719 = vmatprep.subr.bf16.mxu0 0
        %720 = vmatpush1.bf16.msra.mxu0 %v717
        %721 = vmatprep.subr.bf16.mxu0 0
        %722 = vmatpush1.bf16.msra.mxu0 0
        %723 = vmatprep.subr.bf16.mxu0 0
        %724 = vmatpush1.bf16.msra.mxu0 0
        %725 = vmatprep.subr.bf16.mxu0 0
        %726 = vmatpush1.bf16.msra.mxu0 0
        %727 = vmatprep.subr.bf16.mxu0 0
        %728 = vmatpush1.bf16.msra.mxu0 0
        %729 = vmatprep.subr.bf16.mxu0 0
        %730 = vmatpush1.bf16.msra.mxu0 0
        %731 = vmatprep.subr.bf16.mxu0 0
        %732 = vmatpush1.bf16.msra.mxu0 0
        %733 = vmatprep.subr.bf16.mxu0 0
        %734 = vmatpush1.bf16.msra.mxu0 0
        %735 = vmatprep.subr.bf16.mxu0 0
        %736 = vmatpush1.bf16.msra.mxu0 0
        %737 = vmatprep.subr.bf16.mxu0 0
        %738 = vmatpush1.bf16.msra.mxu0 0
        %739 = vmatprep.subr.bf16.mxu0 0
        %740 = vmatpush1.bf16.msra.mxu0 0
        %741 = vmatprep.subr.bf16.mxu0 0
        %742 = vmatpush1.bf16.msra.mxu0 0
        %743 = vmatprep.subr.bf16.mxu0 0
        %744 = vmatpush1.bf16.msra.mxu0 0
        %745 = vmatprep.subr.bf16.mxu0 0
        %746 = vmatpush1.bf16.msra.mxu0 0
        %747 = vmatprep.subr.bf16.mxu0 0
        %748 = vmatpush1.bf16.msra.mxu0 0
        %749 = vmatprep.subr.bf16.mxu0 0
        %750 = vmatpush1.bf16.msra.mxu0 0
        %751 = vmatprep.mubr.bf16.mxu0 0
        %752 = vmatmul.mubr.bf16.gmra.mrb[0].mxu0 %v713
        %v753 = vpop.f32.mrb[0].mxu0
        %v754 = vadd.f32 0.0, %v753
        %v755 = vpop.f32.mrb[0].mxu0
        %v756 = vpop.f32.mrb[0].mxu0
        %v757 = vpop.f32.mrb[0].mxu0
        %758 = vdwg.mxu0
        %759 = vst.msk [vmem:[#allocation3] sm:$0xff] %vm586, %v754
        %v760 = vld [vmem:[%s577] sm:$0xf]
        %v761 = vld [vmem:[#allocation2] sm:$0xf]
        %v762 = vld [vmem:[#allocation2 + $0x4] sm:$0xf]
        %v764 = vunpack.c.l.b16 %v760
        %v765 = vpack.c.b16 %v764, %v764
        %766 = vrot.lane.b32.xlu0 %v765, 120
        %v767 = vpop.permute.xlu0 %766
        %v769 = vunpack.c.l.b16 %v761
        %v770 = vpack.c.b16 %v769, %v769
        %771 = vrot.lane.b32.xlu0 %v770, 88
        %v772 = vpop.permute.xlu0 %771
        %v774 = vsel %vm586, %v767, 0
        %v777 = vsel %vm586, %v772, 0
        %779 = vmatprep.subr.bf16.mxu0 0
        %780 = vmatpush1.bf16.xpose.msra.mxu0 %v777
        %781 = vmatprep.subr.bf16.mxu0 0
        %782 = vmatpush1.bf16.xpose.msra.mxu0 0
        %783 = vmatprep.subr.bf16.mxu0 0
        %784 = vmatpush1.bf16.xpose.msra.mxu0 0
        %785 = vmatprep.subr.bf16.mxu0 0
        %786 = vmatpush1.bf16.xpose.msra.mxu0 0
        %787 = vmatprep.subr.bf16.mxu0 0
        %788 = vmatpush1.bf16.xpose.msra.mxu0 0
        %789 = vmatprep.subr.bf16.mxu0 0
        %790 = vmatpush1.bf16.xpose.msra.mxu0 0
        %791 = vmatprep.subr.bf16.mxu0 0
        %792 = vmatpush1.bf16.xpose.msra.mxu0 0
        %793 = vmatprep.subr.bf16.mxu0 0
        %794 = vmatpush1.bf16.xpose.msra.mxu0 0
        %795 = vmatprep.subr.bf16.mxu0 0
        %796 = vmatpush1.bf16.xpose.msra.mxu0 0
        %797 = vmatprep.subr.bf16.mxu0 0
        %798 = vmatpush1.bf16.xpose.msra.mxu0 0
        %799 = vmatprep.subr.bf16.mxu0 0
        %800 = vmatpush1.bf16.xpose.msra.mxu0 0
        %801 = vmatprep.subr.bf16.mxu0 0
        %802 = vmatpush1.bf16.xpose.msra.mxu0 0
        %803 = vmatprep.subr.bf16.mxu0 0
        %804 = vmatpush1.bf16.xpose.msra.mxu0 0
        %805 = vmatprep.subr.bf16.mxu0 0
        %806 = vmatpush1.bf16.xpose.msra.mxu0 0
        %807 = vmatprep.subr.bf16.mxu0 0
        %808 = vmatpush1.bf16.xpose.msra.mxu0 0
        %809 = vmatprep.subr.bf16.mxu0 0
        %810 = vmatpush1.bf16.xpose.msra.mxu0 0
        %811 = vmatprep.mubr.bf16.mxu0 0
        %812 = vmatmul.mubr.bf16.gmra.mrb[0].mxu0 %v774
        %v813 = vpop.f32.mrb[0].mxu0
        %v814 = vadd.f32 0.0, %v813
        %v815 = vpop.f32.mrb[0].mxu0
        %v816 = vpop.f32.mrb[0].mxu0
        %v817 = vpop.f32.mrb[0].mxu0
        %818 = vdwg.mxu0
        %819 = vrot.lane.b32.xlu0 %v765, 56
        %v820 = vpop.permute.xlu0 %819
        %821 = vrot.lane.b32.xlu0 %v770, 24
        %v822 = vpop.permute.xlu0 %821
        %v824 = vsel %vm586, %v820, 0
        %v827 = vsel %vm586, %v822, 0
        %829 = vmatprep.subr.bf16.mxu0 0
        %830 = vmatpush1.bf16.xpose.msra.mxu0 %v827
        %831 = vmatprep.subr.bf16.mxu0 0
        %832 = vmatpush1.bf16.xpose.msra.mxu0 0
        %833 = vmatprep.subr.bf16.mxu0 0
        %834 = vmatpush1.bf16.xpose.msra.mxu0 0
        %835 = vmatprep.subr.bf16.mxu0 0
        %836 = vmatpush1.bf16.xpose.msra.mxu0 0
        %837 = vmatprep.subr.bf16.mxu0 0
        %838 = vmatpush1.bf16.xpose.msra.mxu0 0
        %839 = vmatprep.subr.bf16.mxu0 0
        %840 = vmatpush1.bf16.xpose.msra.mxu0 0
        %841 = vmatprep.subr.bf16.mxu0 0
        %842 = vmatpush1.bf16.xpose.msra.mxu0 0
        %843 = vmatprep.subr.bf16.mxu0 0
        %844 = vmatpush1.bf16.xpose.msra.mxu0 0
        %845 = vmatprep.subr.bf16.mxu0 0
        %846 = vmatpush1.bf16.xpose.msra.mxu0 0
        %847 = vmatprep.subr.bf16.mxu0 0
        %848 = vmatpush1.bf16.xpose.msra.mxu0 0
        %849 = vmatprep.subr.bf16.mxu0 0
        %850 = vmatpush1.bf16.xpose.msra.mxu0 0
        %851 = vmatprep.subr.bf16.mxu0 0
        %852 = vmatpush1.bf16.xpose.msra.mxu0 0
        %853 = vmatprep.subr.bf16.mxu0 0
        %854 = vmatpush1.bf16.xpose.msra.mxu0 0
        %855 = vmatprep.subr.bf16.mxu0 0
        %856 = vmatpush1.bf16.xpose.msra.mxu0 0
        %857 = vmatprep.subr.bf16.mxu0 0
        %858 = vmatpush1.bf16.xpose.msra.mxu0 0
        %859 = vmatprep.subr.bf16.mxu0 0
        %860 = vmatpush1.bf16.xpose.msra.mxu0 0
        %861 = vmatprep.mubr.bf16.mxu0 0
        %862 = vmatmul.mubr.bf16.gmra.mrb[0].mxu0 %v824
        %v863 = vpop.f32.mrb[0].mxu0
        %v864 = vadd.f32 0.0, %v863
        %v865 = vpop.f32.mrb[0].mxu0
        %v866 = vpop.f32.mrb[0].mxu0
        %v867 = vpop.f32.mrb[0].mxu0
        %868 = vdwg.mxu0
        %v869 = vsel %vm586, %v814, -inf
        %870 = vmax.xlane.f32.xlu0 %v869
        %v871 = vpop.xlane.xlu0 %870
        %v872 = vsub.f32 %v814, %v871
        %v873 = vmul.f32 %v872, 1.442695
        %v874 = vpow.pop %v873
        %v875 = vsel %vm586, %v874, 0.0
        %876 = vadd.xlane.f32.xlu0 %v875
        %v877 = vpop.xlane.xlu0 %876
        %v878 = vrcp.pop %v877
        %v879 = vmul.f32 %v874, %v878
        %v880 = vsel %vm586, %v864, -inf
        %881 = vmax.xlane.f32.xlu0 %v880
        %v882 = vpop.xlane.xlu0 %881
        %v883 = vsub.f32 %v864, %v882
        %v884 = vmul.f32 %v883, 1.442695
        %v885 = vpow.pop %v884
        %v886 = vsel %vm586, %v885, 0.0
        %887 = vadd.xlane.f32.xlu0 %v886
        %v888 = vpop.xlane.xlu0 %887
        %v889 = vrcp.pop %v888
        %v890 = vmul.f32 %v885, %v889
        %v891 = vmul.f32 %v708, %v890
        %v892 = vsub.f32 %v879, %v891
        %v893 = vpack.c.bf16 %v892, %v892
        %v895 = vunpack.c.l.b16 %v762
        %v896 = vpack.c.b16 %v895, %v895
        %897 = vrot.lane.b32.xlu0 %v896, 120
        %v898 = vpop.permute.xlu0 %897
        %v900 = vsel %vm586, %v893, 0
        %v903 = vsel %vm715, %v898, 0
        %905 = vmatprep.subr.bf16.mxu0 0
        %906 = vmatpush1.bf16.msra.mxu0 %v903
        %907 = vmatprep.subr.bf16.mxu0 0
        %908 = vmatpush1.bf16.msra.mxu0 0
        %909 = vmatprep.subr.bf16.mxu0 0
        %910 = vmatpush1.bf16.msra.mxu0 0
        %911 = vmatprep.subr.bf16.mxu0 0
        %912 = vmatpush1.bf16.msra.mxu0 0
        %913 = vmatprep.subr.bf16.mxu0 0
        %914 = vmatpush1.bf16.msra.mxu0 0
        %915 = vmatprep.subr.bf16.mxu0 0
        %916 = vmatpush1.bf16.msra.mxu0 0
        %917 = vmatprep.subr.bf16.mxu0 0
        %918 = vmatpush1.bf16.msra.mxu0 0
        %919 = vmatprep.subr.bf16.mxu0 0
        %920 = vmatpush1.bf16.msra.mxu0 0
        %921 = vmatprep.subr.bf16.mxu0 0
        %922 = vmatpush1.bf16.msra.mxu0 0
        %923 = vmatprep.subr.bf16.mxu0 0
        %924 = vmatpush1.bf16.msra.mxu0 0
        %925 = vmatprep.subr.bf16.mxu0 0
        %926 = vmatpush1.bf16.msra.mxu0 0
        %927 = vmatprep.subr.bf16.mxu0 0
        %928 = vmatpush1.bf16.msra.mxu0 0
        %929 = vmatprep.subr.bf16.mxu0 0
        %930 = vmatpush1.bf16.msra.mxu0 0
        %931 = vmatprep.subr.bf16.mxu0 0
        %932 = vmatpush1.bf16.msra.mxu0 0
        %933 = vmatprep.subr.bf16.mxu0 0
        %934 = vmatpush1.bf16.msra.mxu0 0
        %935 = vmatprep.subr.bf16.mxu0 0
        %936 = vmatpush1.bf16.msra.mxu0 0
        %937 = vmatprep.mubr.bf16.mxu0 0
        %938 = vmatmul.mubr.bf16.gmra.mrb[0].mxu0 %v900
        %v939 = vpop.f32.mrb[0].mxu0
        %v940 = vadd.f32 0.0, %v939
        %v941 = vpop.f32.mrb[0].mxu0
        %v942 = vpop.f32.mrb[0].mxu0
        %v943 = vpop.f32.mrb[0].mxu0
        %944 = vdwg.mxu0
        %946 = vrot.lane.b32.xlu0 %v940, 8
        %v947 = vpop.permute.xlu0 %946
        %vm949 = vcmask 130112
        %950 = vst.msk [vmem:[#allocation3] sm:$0xff] %vm949, %v947
        %v951 = vld [vmem:[%s577] sm:$0xf]
        %v952 = vld [vmem:[#allocation2] sm:$0xf]
        %v953 = vld [vmem:[#allocation2 + $0x4] sm:$0xf]
        %v955 = vunpack.c.l.b16 %v951
        %v956 = vpack.c.b16 %v955, %v955
        %957 = vrot.lane.b32.xlu0 %v956, 112
        %v958 = vpop.permute.xlu0 %957
        %v960 = vunpack.c.l.b16 %v952
        %v961 = vpack.c.b16 %v960, %v960
        %962 = vrot.lane.b32.xlu0 %v961, 80
        %v963 = vpop.permute.xlu0 %962
        %v965 = vsel %vm586, %v958, 0
        %v968 = vsel %vm586, %v963, 0
        %970 = vmatprep.subr.bf16.mxu0 0
        %971 = vmatpush1.bf16.xpose.msra.mxu0 %v968
        %972 = vmatprep.subr.bf16.mxu0 0
        %973 = vmatpush1.bf16.xpose.msra.mxu0 0
        %974 = vmatprep.subr.bf16.mxu0 0
        %975 = vmatpush1.bf16.xpose.msra.mxu0 0
        %976 = vmatprep.subr.bf16.mxu0 0
        %977 = vmatpush1.bf16.xpose.msra.mxu0 0
        %978 = vmatprep.subr.bf16.mxu0 0
        %979 = vmatpush1.bf16.xpose.msra.mxu0 0
        %980 = vmatprep.subr.bf16.mxu0 0
        %981 = vmatpush1.bf16.xpose.msra.mxu0 0
        %982 = vmatprep.subr.bf16.mxu0 0
        %983 = vmatpush1.bf16.xpose.msra.mxu0 0
        %984 = vmatprep.subr.bf16.mxu0 0
        %985 = vmatpush1.bf16.xpose.msra.mxu0 0
        %986 = vmatprep.subr.bf16.mxu0 0
        %987 = vmatpush1.bf16.xpose.msra.mxu0 0
        %988 = vmatprep.subr.bf16.mxu0 0
        %989 = vmatpush1.bf16.xpose.msra.mxu0 0
        %990 = vmatprep.subr.bf16.mxu0 0
        %991 = vmatpush1.bf16.xpose.msra.mxu0 0
        %992 = vmatprep.subr.bf16.mxu0 0
        %993 = vmatpush1.bf16.xpose.msra.mxu0 0
        %994 = vmatprep.subr.bf16.mxu0 0
        %995 = vmatpush1.bf16.xpose.msra.mxu0 0
        %996 = vmatprep.subr.bf16.mxu0 0
        %997 = vmatpush1.bf16.xpose.msra.mxu0 0
        %998 = vmatprep.subr.bf16.mxu0 0
        %999 = vmatpush1.bf16.xpose.msra.mxu0 0
        %1000 = vmatprep.subr.bf16.mxu0 0
        %1001 = vmatpush1.bf16.xpose.msra.mxu0 0
        %1002 = vmatprep.mubr.bf16.mxu0 0
        %1003 = vmatmul.mubr.bf16.gmra.mrb[0].mxu0 %v965
        %v1004 = vpop.f32.mrb[0].mxu0
        %v1005 = vadd.f32 0.0, %v1004
        %v1006 = vpop.f32.mrb[0].mxu0
        %v1007 = vpop.f32.mrb[0].mxu0
        %v1008 = vpop.f32.mrb[0].mxu0
        %1009 = vdwg.mxu0
        %1010 = vrot.lane.b32.xlu0 %v956, 48
        %v1011 = vpop.permute.xlu0 %1010
        %1012 = vrot.lane.b32.xlu0 %v961, 16
        %v1013 = vpop.permute.xlu0 %1012
        %v1015 = vsel %vm586, %v1011, 0
        %v1018 = vsel %vm586, %v1013, 0
        %1020 = vmatprep.subr.bf16.mxu0 0
        %1021 = vmatpush1.bf16.xpose.msra.mxu0 %v1018
        %1022 = vmatprep.subr.bf16.mxu0 0
        %1023 = vmatpush1.bf16.xpose.msra.mxu0 0
        %1024 = vmatprep.subr.bf16.mxu0 0
        %1025 = vmatpush1.bf16.xpose.msra.mxu0 0
        %1026 = vmatprep.subr.bf16.mxu0 0
        %1027 = vmatpush1.bf16.xpose.msra.mxu0 0
        %1028 = vmatprep.subr.bf16.mxu0 0
        %1029 = vmatpush1.bf16.xpose.msra.mxu0 0
        %1030 = vmatprep.subr.bf16.mxu0 0
        %1031 = vmatpush1.bf16.xpose.msra.mxu0 0
        %1032 = vmatprep.subr.bf16.mxu0 0
        %1033 = vmatpush1.bf16.xpose.msra.mxu0 0
        %1034 = vmatprep.subr.bf16.mxu0 0
        %1035 = vmatpush1.bf16.xpose.msra.mxu0 0
        %1036 = vmatprep.subr.bf16.mxu0 0
        %1037 = vmatpush1.bf16.xpose.msra.mxu0 0
        %1038 = vmatprep.subr.bf16.mxu0 0
        %1039 = vmatpush1.bf16.xpose.msra.mxu0 0
        %1040 = vmatprep.subr.bf16.mxu0 0
        %1041 = vmatpush1.bf16.xpose.msra.mxu0 0
        %1042 = vmatprep.subr.bf16.mxu0 0
        %1043 = vmatpush1.bf16.xpose.msra.mxu0 0
        %1044 = vmatprep.subr.bf16.mxu0 0
        %1045 = vmatpush1.bf16.xpose.msra.mxu0 0
        %1046 = vmatprep.subr.bf16.mxu0 0
        %1047 = vmatpush1.bf16.xpose.msra.mxu0 0
        %1048 = vmatprep.subr.bf16.mxu0 0
        %1049 = vmatpush1.bf16.xpose.msra.mxu0 0
        %1050 = vmatprep.subr.bf16.mxu0 0
        %1051 = vmatpush1.bf16.xpose.msra.mxu0 0
        %1052 = vmatprep.mubr.bf16.mxu0 0
        %1053 = vmatmul.mubr.bf16.gmra.mrb[0].mxu0 %v1015
        %v1054 = vpop.f32.mrb[0].mxu0
        %v1055 = vadd.f32 0.0, %v1054
        %v1056 = vpop.f32.mrb[0].mxu0
        %v1057 = vpop.f32.mrb[0].mxu0
        %v1058 = vpop.f32.mrb[0].mxu0
        %1059 = vdwg.mxu0
        %v1060 = vsel %vm586, %v1005, -inf
        %1061 = vmax.xlane.f32.xlu0 %v1060
        %v1062 = vpop.xlane.xlu0 %1061
        %v1063 = vsub.f32 %v1005, %v1062
        %v1064 = vmul.f32 %v1063, 1.442695
        %v1065 = vpow.pop %v1064
        %v1066 = vsel %vm586, %v1065, 0.0
        %1067 = vadd.xlane.f32.xlu0 %v1066
        %v1068 = vpop.xlane.xlu0 %1067
        %v1069 = vrcp.pop %v1068
        %v1070 = vmul.f32 %v1065, %v1069
        %v1071 = vsel %vm586, %v1055, -inf
        %1072 = vmax.xlane.f32.xlu0 %v1071
        %v1073 = vpop.xlane.xlu0 %1072
        %v1074 = vsub.f32 %v1055, %v1073
        %v1075 = vmul.f32 %v1074, 1.442695
        %v1076 = vpow.pop %v1075
        %v1077 = vsel %vm586, %v1076, 0.0
        %1078 = vadd.xlane.f32.xlu0 %v1077
        %v1079 = vpop.xlane.xlu0 %1078
        %v1080 = vrcp.pop %v1079
        %v1081 = vmul.f32 %v1076, %v1080
        %v1082 = vmul.f32 %v708, %v1081
        %v1083 = vsub.f32 %v1070, %v1082
        %v1084 = vpack.c.bf16 %v1083, %v1083
        %v1086 = vunpack.c.l.b16 %v953
        %v1087 = vpack.c.b16 %v1086, %v1086
        %1088 = vrot.lane.b32.xlu0 %v1087, 112
        %v1089 = vpop.permute.xlu0 %1088
        %v1091 = vsel %vm586, %v1084, 0
        %v1094 = vsel %vm715, %v1089, 0
        %1096 = vmatprep.subr.bf16.mxu0 0
        %1097 = vmatpush1.bf16.msra.mxu0 %v1094
        %1098 = vmatprep.subr.bf16.mxu0 0
        %1099 = vmatpush1.bf16.msra.mxu0 0
        %1100 = vmatprep.subr.bf16.mxu0 0
        %1101 = vmatpush1.bf16.msra.mxu0 0
        %1102 = vmatprep.subr.bf16.mxu0 0
        %1103 = vmatpush1.bf16.msra.mxu0 0
        %1104 = vmatprep.subr.bf16.mxu0 0
        %1105 = vmatpush1.bf16.msra.mxu0 0
        %1106 = vmatprep.subr.bf16.mxu0 0
        %1107 = vmatpush1.bf16.msra.mxu0 0
        %1108 = vmatprep.subr.bf16.mxu0 0
        %1109 = vmatpush1.bf16.msra.mxu0 0
        %1110 = vmatprep.subr.bf16.mxu0 0
        %1111 = vmatpush1.bf16.msra.mxu0 0
        %1112 = vmatprep.subr.bf16.mxu0 0
        %1113 = vmatpush1.bf16.msra.mxu0 0
        %1114 = vmatprep.subr.bf16.mxu0 0
        %1115 = vmatpush1.bf16.msra.mxu0 0
        %1116 = vmatprep.subr.bf16.mxu0 0
        %1117 = vmatpush1.bf16.msra.mxu0 0
        %1118 = vmatprep.subr.bf16.mxu0 0
        %1119 = vmatpush1.bf16.msra.mxu0 0
        %1120 = vmatprep.subr.bf16.mxu0 0
        %1121 = vmatpush1.bf16.msra.mxu0 0
        %1122 = vmatprep.subr.bf16.mxu0 0
        %1123 = vmatpush1.bf16.msra.mxu0 0
        %1124 = vmatprep.subr.bf16.mxu0 0
        %1125 = vmatpush1.bf16.msra.mxu0 0
        %1126 = vmatprep.subr.bf16.mxu0 0
        %1127 = vmatpush1.bf16.msra.mxu0 0
        %1128 = vmatprep.mubr.bf16.mxu0 0
        %1129 = vmatmul.mubr.bf16.gmra.mrb[0].mxu0 %v1091
        %v1130 = vpop.f32.mrb[0].mxu0
        %v1131 = vadd.f32 0.0, %v1130
        %v1132 = vpop.f32.mrb[0].mxu0
        %v1133 = vpop.f32.mrb[0].mxu0
        %v1134 = vpop.f32.mrb[0].mxu0
        %1135 = vdwg.mxu0
        %1137 = vrot.lane.b32.xlu0 %v1131, 16
        %v1138 = vpop.permute.xlu0 %1137
        %vm1140 = vcmask 195712
        %1141 = vst.msk [vmem:[#allocation3] sm:$0xff] %vm1140, %v1138
        %v1142 = vld [vmem:[%s577] sm:$0xf]
        %v1143 = vld [vmem:[#allocation2] sm:$0xf]
        %v1144 = vld [vmem:[#allocation2 + $0x4] sm:$0xf]
        %v1146 = vunpack.c.l.b16 %v1142
        %v1147 = vpack.c.b16 %v1146, %v1146
        %1148 = vrot.lane.b32.xlu0 %v1147, 104
        %v1149 = vpop.permute.xlu0 %1148
        %v1151 = vunpack.c.l.b16 %v1143
        %v1152 = vpack.c.b16 %v1151, %v1151
        %1153 = vrot.lane.b32.xlu0 %v1152, 72
        %v1154 = vpop.permute.xlu0 %1153
        %v1156 = vsel %vm586, %v1149, 0
        %v1159 = vsel %vm586, %v1154, 0
        %1161 = vmatprep.subr.bf16.mxu0 0
        %1162 = vmatpush1.bf16.xpose.msra.mxu0 %v1159
        %1163 = vmatprep.subr.bf16.mxu0 0
        %1164 = vmatpush1.bf16.xpose.msra.mxu0 0
        %1165 = vmatprep.subr.bf16.mxu0 0
        %1166 = vmatpush1.bf16.xpose.msra.mxu0 0
        %1167 = vmatprep.subr.bf16.mxu0 0
        %1168 = vmatpush1.bf16.xpose.msra.mxu0 0
        %1169 = vmatprep.subr.bf16.mxu0 0
        %1170 = vmatpush1.bf16.xpose.msra.mxu0 0
        %1171 = vmatprep.subr.bf16.mxu0 0
        %1172 = vmatpush1.bf16.xpose.msra.mxu0 0
        %1173 = vmatprep.subr.bf16.mxu0 0
        %1174 = vmatpush1.bf16.xpose.msra.mxu0 0
        %1175 = vmatprep.subr.bf16.mxu0 0
        %1176 = vmatpush1.bf16.xpose.msra.mxu0 0
        %1177 = vmatprep.subr.bf16.mxu0 0
        %1178 = vmatpush1.bf16.xpose.msra.mxu0 0
        %1179 = vmatprep.subr.bf16.mxu0 0
        %1180 = vmatpush1.bf16.xpose.msra.mxu0 0
        %1181 = vmatprep.subr.bf16.mxu0 0
        %1182 = vmatpush1.bf16.xpose.msra.mxu0 0
        %1183 = vmatprep.subr.bf16.mxu0 0
        %1184 = vmatpush1.bf16.xpose.msra.mxu0 0
        %1185 = vmatprep.subr.bf16.mxu0 0
        %1186 = vmatpush1.bf16.xpose.msra.mxu0 0
        %1187 = vmatprep.subr.bf16.mxu0 0
        %1188 = vmatpush1.bf16.xpose.msra.mxu0 0
        %1189 = vmatprep.subr.bf16.mxu0 0
        %1190 = vmatpush1.bf16.xpose.msra.mxu0 0
        %1191 = vmatprep.subr.bf16.mxu0 0
        %1192 = vmatpush1.bf16.xpose.msra.mxu0 0
        %1193 = vmatprep.mubr.bf16.mxu0 0
        %1194 = vmatmul.mubr.bf16.gmra.mrb[0].mxu0 %v1156
        %v1195 = vpop.f32.mrb[0].mxu0
        %v1196 = vadd.f32 0.0, %v1195
        %v1197 = vpop.f32.mrb[0].mxu0
        %v1198 = vpop.f32.mrb[0].mxu0
        %v1199 = vpop.f32.mrb[0].mxu0
        %1200 = vdwg.mxu0
        %1201 = vrot.lane.b32.xlu0 %v1147, 40
        %v1202 = vpop.permute.xlu0 %1201
        %1203 = vrot.lane.b32.xlu0 %v1152, 8
        %v1204 = vpop.permute.xlu0 %1203
        %v1206 = vsel %vm586, %v1202, 0
        %v1209 = vsel %vm586, %v1204, 0
        %1211 = vmatprep.subr.bf16.mxu0 0
        %1212 = vmatpush1.bf16.xpose.msra.mxu0 %v1209
        %1213 = vmatprep.subr.bf16.mxu0 0
        %1214 = vmatpush1.bf16.xpose.msra.mxu0 0
        %1215 = vmatprep.subr.bf16.mxu0 0
        %1216 = vmatpush1.bf16.xpose.msra.mxu0 0
        %1217 = vmatprep.subr.bf16.mxu0 0
        %1218 = vmatpush1.bf16.xpose.msra.mxu0 0
        %1219 = vmatprep.subr.bf16.mxu0 0
        %1220 = vmatpush1.bf16.xpose.msra.mxu0 0
        %1221 = vmatprep.subr.bf16.mxu0 0
        %1222 = vmatpush1.bf16.xpose.msra.mxu0 0
        %1223 = vmatprep.subr.bf16.mxu0 0
        %1224 = vmatpush1.bf16.xpose.msra.mxu0 0
        %1225 = vmatprep.subr.bf16.mxu0 0
        %1226 = vmatpush1.bf16.xpose.msra.mxu0 0
        %1227 = vmatprep.subr.bf16.mxu0 0
        %1228 = vmatpush1.bf16.xpose.msra.mxu0 0
        %1229 = vmatprep.subr.bf16.mxu0 0
        %1230 = vmatpush1.bf16.xpose.msra.mxu0 0
        %1231 = vmatprep.subr.bf16.mxu0 0
        %1232 = vmatpush1.bf16.xpose.msra.mxu0 0
        %1233 = vmatprep.subr.bf16.mxu0 0
        %1234 = vmatpush1.bf16.xpose.msra.mxu0 0
        %1235 = vmatprep.subr.bf16.mxu0 0
        %1236 = vmatpush1.bf16.xpose.msra.mxu0 0
        %1237 = vmatprep.subr.bf16.mxu0 0
        %1238 = vmatpush1.bf16.xpose.msra.mxu0 0
        %1239 = vmatprep.subr.bf16.mxu0 0
        %1240 = vmatpush1.bf16.xpose.msra.mxu0 0
        %1241 = vmatprep.subr.bf16.mxu0 0
        %1242 = vmatpush1.bf16.xpose.msra.mxu0 0
        %1243 = vmatprep.mubr.bf16.mxu0 0
        %1244 = vmatmul.mubr.bf16.gmra.mrb[0].mxu0 %v1206
        %v1245 = vpop.f32.mrb[0].mxu0
        %v1246 = vadd.f32 0.0, %v1245
        %v1247 = vpop.f32.mrb[0].mxu0
        %v1248 = vpop.f32.mrb[0].mxu0
        %v1249 = vpop.f32.mrb[0].mxu0
        %1250 = vdwg.mxu0
        %v1251 = vsel %vm586, %v1196, -inf
        %1252 = vmax.xlane.f32.xlu0 %v1251
        %v1253 = vpop.xlane.xlu0 %1252
        %v1254 = vsub.f32 %v1196, %v1253
        %v1255 = vmul.f32 %v1254, 1.442695
        %v1256 = vpow.pop %v1255
        %v1257 = vsel %vm586, %v1256, 0.0
        %1258 = vadd.xlane.f32.xlu0 %v1257
        %v1259 = vpop.xlane.xlu0 %1258
        %v1260 = vrcp.pop %v1259
        %v1261 = vmul.f32 %v1256, %v1260
        %v1262 = vsel %vm586, %v1246, -inf
        %1263 = vmax.xlane.f32.xlu0 %v1262
        %v1264 = vpop.xlane.xlu0 %1263
        %v1265 = vsub.f32 %v1246, %v1264
        %v1266 = vmul.f32 %v1265, 1.442695
        %v1267 = vpow.pop %v1266
        %v1268 = vsel %vm586, %v1267, 0.0
        %1269 = vadd.xlane.f32.xlu0 %v1268
        %v1270 = vpop.xlane.xlu0 %1269
        %v1271 = vrcp.pop %v1270
        %v1272 = vmul.f32 %v1267, %v1271
        %v1273 = vmul.f32 %v708, %v1272
        %v1274 = vsub.f32 %v1261, %v1273
        %v1275 = vpack.c.bf16 %v1274, %v1274
        %v1277 = vunpack.c.l.b16 %v1144
        %v1278 = vpack.c.b16 %v1277, %v1277
        %1279 = vrot.lane.b32.xlu0 %v1278, 104
        %v1280 = vpop.permute.xlu0 %1279
        %v1282 = vsel %vm586, %v1275, 0
        %v1285 = vsel %vm715, %v1280, 0
        %1287 = vmatprep.subr.bf16.mxu0 0
        %1288 = vmatpush1.bf16.msra.mxu0 %v1285
        %1289 = vmatprep.subr.bf16.mxu0 0
        %1290 = vmatpush1.bf16.msra.mxu0 0
        %1291 = vmatprep.subr.bf16.mxu0 0
        %1292 = vmatpush1.bf16.msra.mxu0 0
        %1293 = vmatprep.subr.bf16.mxu0 0
        %1294 = vmatpush1.bf16.msra.mxu0 0
        %1295 = vmatprep.subr.bf16.mxu0 0
        %1296 = vmatpush1.bf16.msra.mxu0 0
        %1297 = vmatprep.subr.bf16.mxu0 0
        %1298 = vmatpush1.bf16.msra.mxu0 0
        %1299 = vmatprep.subr.bf16.mxu0 0
        %1300 = vmatpush1.bf16.msra.mxu0 0
        %1301 = vmatprep.subr.bf16.mxu0 0
        %1302 = vmatpush1.bf16.msra.mxu0 0
        %1303 = vmatprep.subr.bf16.mxu0 0
        %1304 = vmatpush1.bf16.msra.mxu0 0
        %1305 = vmatprep.subr.bf16.mxu0 0
        %1306 = vmatpush1.bf16.msra.mxu0 0
        %1307 = vmatprep.subr.bf16.mxu0 0
        %1308 = vmatpush1.bf16.msra.mxu0 0
        %1309 = vmatprep.subr.bf16.mxu0 0
        %1310 = vmatpush1.bf16.msra.mxu0 0
        %1311 = vmatprep.subr.bf16.mxu0 0
        %1312 = vmatpush1.bf16.msra.mxu0 0
        %1313 = vmatprep.subr.bf16.mxu0 0
        %1314 = vmatpush1.bf16.msra.mxu0 0
        %1315 = vmatprep.subr.bf16.mxu0 0
        %1316 = vmatpush1.bf16.msra.mxu0 0
        %1317 = vmatprep.subr.bf16.mxu0 0
        %1318 = vmatpush1.bf16.msra.mxu0 0
        %1319 = vmatprep.mubr.bf16.mxu0 0
        %1320 = vmatmul.mubr.bf16.gmra.mrb[0].mxu0 %v1282
        %v1321 = vpop.f32.mrb[0].mxu0
        %v1322 = vadd.f32 0.0, %v1321
        %v1323 = vpop.f32.mrb[0].mxu0
        %v1324 = vpop.f32.mrb[0].mxu0
        %v1325 = vpop.f32.mrb[0].mxu0
        %1326 = vdwg.mxu0
        %1328 = vrot.lane.b32.xlu0 %v1322, 24
        %v1329 = vpop.permute.xlu0 %1328
        %vm1331 = vcmask 261312
        %1332 = vst.msk [vmem:[#allocation3] sm:$0xff] %vm1331, %v1329
        %v1333 = vld [vmem:[#allocation3] sm:$0xff]
        %v1334 = vld [vmem:[%s4] sm:$0x1]
        %v1335 = vld [vmem:[%s5] sm:$0x1]
        %vm1336 = vcmask 261120
        %v1337 = vsel %vm1336, %v1333, 0.0
        %1338 = vadd.xlane.f32.xlu0 %v1337
        %v1339 = vpop.xlane.xlu0 %1338
        %v1340 = vrcp.pop 32.0
        %v1341 = vmul.f32 %v1339, %v1340
        %v1342 = vsub.f32 %v1333, %v1341
        %v1343 = vmul.f32 %v1342, %v1342
        %v1344 = vsel %vm1336, %v1343, 0.0
        %1345 = vadd.xlane.f32.xlu0 %v1344
        %v1346 = vpop.xlane.xlu0 %1345
        %v1347 = vmul.f32 %v1346, %v1340
        %v1348 = vadd.f32 %v1347, 1e-05
        %v1349 = vrsqrt.pop %v1348
        %v1350 = vmul.f32 %v1342, %v1349
        %v1352 = vlaneseq
        %v1353 = vshrl.u32 %v1352, 7
        %v1354 = vsub.s32 0, %v1353
        %v1355 = vrot.slane %v1334, %v1354
        %v1357 = vmul.f32 %v1350, %v1355
        %v1359 = vlaneseq
        %v1360 = vshrl.u32 %v1359, 7
        %v1361 = vsub.s32 0, %v1360
        %v1362 = vrot.slane %v1335, %v1361
        %v1364 = vadd.f32 %v1357, %v1362
        %s1365 = ssub.f32 1.0, %s452
        %v1366 = vstv %s1365
        %v1367 = vmul.f32 %v1366, %v1364
        %v1368 = vadd.f32 %v572, %v1367
        %v1369 = vld [vmem:[%s7] sm:$0x1]
        %v1370 = vld [vmem:[%s8] sm:$0x1]
        %v1371 = vsel %vm1336, %v1368, 0.0
        %1372 = vadd.xlane.f32.xlu0 %v1371
        %v1373 = vpop.xlane.xlu0 %1372
        %v1374 = vmul.f32 %v1373, %v1340
        %v1375 = vsub.f32 %v1368, %v1374
        %v1376 = vmul.f32 %v1375, %v1375
        %v1377 = vsel %vm1336, %v1376, 0.0
        %1378 = vadd.xlane.f32.xlu0 %v1377
        %v1379 = vpop.xlane.xlu0 %1378
        %v1380 = vmul.f32 %v1379, %v1340
        %v1381 = vadd.f32 %v1380, 1e-05
        %v1382 = vrsqrt.pop %v1381
        %v1383 = vmul.f32 %v1375, %v1382
        %v1385 = vlaneseq
        %v1386 = vshrl.u32 %v1385, 7
        %v1387 = vsub.s32 0, %v1386
        %v1388 = vrot.slane %v1369, %v1387
        %v1390 = vmul.f32 %v1383, %v1388
        %v1392 = vlaneseq
        %v1393 = vshrl.u32 %v1392, 7
        %v1394 = vsub.s32 0, %v1393
        %v1395 = vrot.slane %v1370, %v1394
        %v1397 = vadd.f32 %v1390, %v1395
        %v1398 = vpack.c.bf16 %v1397, %v1397
        %v1399 = vld [vmem:[%s9] sm:$0xf]
        %v1400 = vld [vmem:[%s9 + $0x4] sm:$0xf]
        %v1401 = vld [vmem:[%s9 + $0x8] sm:$0xf]
        %v1402 = vld [vmem:[%s9 + $0xc] sm:$0xf]
        %v1403 = vld [vmem:[%s10] sm:$0x1]
        %v1405 = vlaneseq
        %v1406 = vshrl.u32 %v1405, 7
        %v1407 = vsub.s32 0, %v1406
        %v1408 = vrot.slane %v1403, %v1407
        %v1414 = vunpack.c.l.b16 %v1399
        %v1415 = vunpack.c.l.b16 %v1400
        %v1416 = vunpack.c.l.b16 %v1401
        %v1417 = vunpack.c.l.b16 %v1402
        %v1418 = vpack.c.b16 %v1415, %v1414
        %v1419 = vpack.c.b16 %v1417, %v1416
        %v1423 = vsel %vm1336, %v1398, 0
        %1425 = vmatprep.subr.bf16.mxu0 0
        %1426 = vmatpush1.bf16.msra.mxu0 %v1418
        %1427 = vmatprep.subr.bf16.mxu0 0
        %1428 = vmatpush1.bf16.msra.mxu0 %v1419
        %1429 = vmatprep.subr.bf16.mxu0 0
        %1430 = vmatpush1.bf16.msra.mxu0 0
        %1431 = vmatprep.subr.bf16.mxu0 0
        %1432 = vmatpush1.bf16.msra.mxu0 0
        %1433 = vmatprep.subr.bf16.mxu0 0
        %1434 = vmatpush1.bf16.msra.mxu0 0
        %1435 = vmatprep.subr.bf16.mxu0 0
        %1436 = vmatpush1.bf16.msra.mxu0 0
        %1437 = vmatprep.subr.bf16.mxu0 0
        %1438 = vmatpush1.bf16.msra.mxu0 0
        %1439 = vmatprep.subr.bf16.mxu0 0
        %1440 = vmatpush1.bf16.msra.mxu0 0
        %1441 = vmatprep.subr.bf16.mxu0 0
        %1442 = vmatpush1.bf16.msra.mxu0 0
        %1443 = vmatprep.subr.bf16.mxu0 0
        %1444 = vmatpush1.bf16.msra.mxu0 0
        %1445 = vmatprep.subr.bf16.mxu0 0
        %1446 = vmatpush1.bf16.msra.mxu0 0
        %1447 = vmatprep.subr.bf16.mxu0 0
        %1448 = vmatpush1.bf16.msra.mxu0 0
        %1449 = vmatprep.subr.bf16.mxu0 0
        %1450 = vmatpush1.bf16.msra.mxu0 0
        %1451 = vmatprep.subr.bf16.mxu0 0
        %1452 = vmatpush1.bf16.msra.mxu0 0
        %1453 = vmatprep.subr.bf16.mxu0 0
        %1454 = vmatpush1.bf16.msra.mxu0 0
        %1455 = vmatprep.subr.bf16.mxu0 0
        %1456 = vmatpush1.bf16.msra.mxu0 0
        %1457 = vmatprep.mubr.bf16.mxu0 0
        %1458 = vmatmul.mubr.bf16.gmra.mrb[0].mxu0 %v1423
        %v1459 = vpop.f32.mrb[0].mxu0
        %v1460 = vadd.f32 %v1408, %v1459
        %v1461 = vpop.f32.mrb[0].mxu0
        %v1462 = vpop.f32.mrb[0].mxu0
        %v1463 = vpop.f32.mrb[0].mxu0
        %1464 = vdwg.mxu0
        %v1465 = vmax.f32 %v1460, 0.0
        %v1466 = vpack.c.bf16 %v1465, %v1465
        %v1467 = vld [vmem:[%s11] sm:$0xf]
        %v1468 = vld [vmem:[%s11 + $0x4] sm:$0xf]
        %v1469 = vld [vmem:[%s11 + $0x8] sm:$0xf]
        %v1470 = vld [vmem:[%s11 + $0xc] sm:$0xf]
        %v1471 = vld [vmem:[%s11 + $0x10] sm:$0xf]
        %v1472 = vld [vmem:[%s11 + $0x14] sm:$0xf]
        %v1473 = vld [vmem:[%s11 + $0x18] sm:$0xf]
        %v1474 = vld [vmem:[%s11 + $0x1c] sm:$0xf]
        %v1475 = vld [vmem:[%s11 + $0x20] sm:$0xf]
        %v1476 = vld [vmem:[%s11 + $0x24] sm:$0xf]
        %v1477 = vld [vmem:[%s11 + $0x28] sm:$0xf]
        %v1478 = vld [vmem:[%s11 + $0x2c] sm:$0xf]
        %v1479 = vld [vmem:[%s11 + $0x30] sm:$0xf]
        %v1480 = vld [vmem:[%s11 + $0x34] sm:$0xf]
        %v1481 = vld [vmem:[%s11 + $0x38] sm:$0xf]
        %v1482 = vld [vmem:[%s11 + $0x3c] sm:$0xf]
        %v1483 = vld [vmem:[%s12] sm:$0x1]
        %v1485 = vlaneseq
        %v1486 = vshrl.u32 %v1485, 7
        %v1487 = vsub.s32 0, %v1486
        %v1488 = vrot.slane %v1483, %v1487
        %v1506 = vunpack.c.l.b16 %v1467
        %v1507 = vunpack.c.l.b16 %v1468
        %v1508 = vunpack.c.l.b16 %v1469
        %v1509 = vunpack.c.l.b16 %v1470
        %v1510 = vunpack.c.l.b16 %v1471
        %v1511 = vunpack.c.l.b16 %v1472
        %v1512 = vunpack.c.l.b16 %v1473
        %v1513 = vunpack.c.l.b16 %v1474
        %v1514 = vunpack.c.l.b16 %v1475
        %v1515 = vunpack.c.l.b16 %v1476
        %v1516 = vunpack.c.l.b16 %v1477
        %v1517 = vunpack.c.l.b16 %v1478
        %v1518 = vunpack.c.l.b16 %v1479
        %v1519 = vunpack.c.l.b16 %v1480
        %v1520 = vunpack.c.l.b16 %v1481
        %v1521 = vunpack.c.l.b16 %v1482
        %v1522 = vpack.c.b16 %v1507, %v1506
        %v1523 = vpack.c.b16 %v1509, %v1508
        %v1524 = vpack.c.b16 %v1511, %v1510
        %v1525 = vpack.c.b16 %v1513, %v1512
        %v1526 = vpack.c.b16 %v1515, %v1514
        %v1527 = vpack.c.b16 %v1517, %v1516
        %v1528 = vpack.c.b16 %v1519, %v1518
        %v1529 = vpack.c.b16 %v1521, %v1520
        %1538 = vmatprep.subr.bf16.mxu0 0
        %1539 = vmatpush1.bf16.msra.mxu0 %v1522
        %1540 = vmatprep.subr.bf16.mxu0 0
        %1541 = vmatpush1.bf16.msra.mxu0 %v1523
        %1542 = vmatprep.subr.bf16.mxu0 0
        %1543 = vmatpush1.bf16.msra.mxu0 %v1524
        %1544 = vmatprep.subr.bf16.mxu0 0
        %1545 = vmatpush1.bf16.msra.mxu0 %v1525
        %1546 = vmatprep.subr.bf16.mxu0 0
        %1547 = vmatpush1.bf16.msra.mxu0 %v1526
        %1548 = vmatprep.subr.bf16.mxu0 0
        %1549 = vmatpush1.bf16.msra.mxu0 %v1527
        %1550 = vmatprep.subr.bf16.mxu0 0
        %1551 = vmatpush1.bf16.msra.mxu0 %v1528
        %1552 = vmatprep.subr.bf16.mxu0 0
        %1553 = vmatpush1.bf16.msra.mxu0 %v1529
        %1554 = vmatprep.subr.bf16.mxu0 0
        %1555 = vmatpush1.bf16.msra.mxu0 0
        %1556 = vmatprep.subr.bf16.mxu0 0
        %1557 = vmatpush1.bf16.msra.mxu0 0
        %1558 = vmatprep.subr.bf16.mxu0 0
        %1559 = vmatpush1.bf16.msra.mxu0 0
        %1560 = vmatprep.subr.bf16.mxu0 0
        %1561 = vmatpush1.bf16.msra.mxu0 0
        %1562 = vmatprep.subr.bf16.mxu0 0
        %1563 = vmatpush1.bf16.msra.mxu0 0
        %1564 = vmatprep.subr.bf16.mxu0 0
        %1565 = vmatpush1.bf16.msra.mxu0 0
        %1566 = vmatprep.subr.bf16.mxu0 0
        %1567 = vmatpush1.bf16.msra.mxu0 0
        %1568 = vmatprep.subr.bf16.mxu0 0
        %1569 = vmatpush1.bf16.msra.mxu0 0
        %1570 = vmatprep.mubr.bf16.mxu0 0
        %1571 = vmatmul.mubr.bf16.gmra.mrb[0].mxu0 %v1466
        %v1572 = vpop.f32.mrb[0].mxu0
        %v1573 = vadd.f32 %v1488, %v1572
        %v1574 = vpop.f32.mrb[0].mxu0
        %v1575 = vpop.f32.mrb[0].mxu0
        %v1576 = vpop.f32.mrb[0].mxu0
        %1577 = vdwg.mxu0
        %v1578 = vadd.f32 %v1368, %v1573
        %1579 = vst.msk [vmem:[%s446] sm:$0xff] %vm1336, %v1578
        %s1580 = sand.u32 %s328, 1
        %s1581 = scalar_lea.sflag [#allocation6], %s1580
        %s1582 = sand.u32 %s328, 1
        %s1583 = smul.addr %s1582, 8
        %s1584 = scalar_lea.vmem [#allocation5], %s1583
        // Predicated region
        $region77: #{tpu_custom_call.1} parent=71 // pred_check
          %p1585 = pneg %p338
        $region78: #{tpu_custom_call.1} parent=71 // pred_check_branch
          %1587 = sbr.rel (%p1585) target = $region80
        $region79: #{tpu_custom_call.1} parent=71 // pred_region
          %s1589 = ssub.s32 128, 128
          %1590 = vsyncadd %s1581, %s1589
          %s1591 = sadd.s32 %s33, %s32
          %s1592 = smul.addr %s1591, 128
          %s1593 = scalar_lea.hbm %s13, %s1592
          %s1595 = sshll.u32 %s1584, 4
          %s1596 = int_to_ptr.vmem [resolvable:$true] %s1595
          %1598 = dma.vmem_to_hbm [thread:$0]  %s1596, 128, %s1593, %s1581
        $region80: #{tpu_custom_call.1} parent=71 // pred_fallthru
          _
      $region72: #{tpu_custom_call.1} parent=5 // pred_fallthru
        _
      %p1599 = scmp.le.s32.totalorder 2, %s23
      // Predicated region
      $region81: #{tpu_custom_call.1} parent=5 // pred_check
        %p1600 = pneg %p1599
      $region82: #{tpu_custom_call.1} parent=5 // pred_check_branch
        %1602 = sbr.rel (%p1600) target = $region84
      $region83: #{tpu_custom_call.1} parent=5 // pred_region
        %s1603 = ssub.s32 %s23, 2
        // Predicated region
        $region85: #{tpu_custom_call.1} parent=83 // pred_check
          %p1604 = pneg %p344
        $region86: #{tpu_custom_call.1} parent=83 // pred_check_branch
          %1606 = sbr.rel (%p1604) target = $region88
        $region87: #{tpu_custom_call.1} parent=83 // pred_region
          %s1607 = sand.u32 %s329, 1
          %s1608 = scalar_lea.sflag [#allocation6], %s1607
          %s1609 = sand.u32 %s329, 1
          %s1610 = smul.addr %s1609, 8
          %s1611 = scalar_lea.vmem [#allocation5], %s1610
          %1612 = dma.done %s1608, 128
        $region88: #{tpu_custom_call.1} parent=83 // pred_fallthru
          _
      $region84: #{tpu_custom_call.1} parent=5 // pred_fallthru
        _
    $region6: #{tpu_custom_call.1} parent=1 // loop_footer
      %s27 = sadd.s32 1, %s23
    $region7: #{tpu_custom_call.1} parent=1 // loop_footer_branch
      %22 = sbr.rel target = $region3
    $region8: #{tpu_custom_call.1} parent=1 // loop_exit
      _
    %1613 = vsyncpa [#allocation6], 1
    %s1614 = scalar_lea.sflag [#allocation6], 1
    %1615 = vsyncpa %s1614, 1

</llo_original>
